<compile_context>
chip_gen: v7x
topology: tpu7x:2x2x1
jax: 0.10.0
libtpu: 0.0.40
codegen_flags: <defaults>
</compile_context>

<pallas_src>
import functools

import jax
import jax.numpy as jnp
from jax.experimental import pallas as pl
from jax.experimental.pallas import tpu as pltpu

_SQRT_HALF = 0.7071067811865476
_GN_EPS = 1e-5


def _erf(x):
    # TODO(synk): Mosaic has no erf lowering; Abramowitz&Stegun 7.1.26 (|err| < 1.5e-7)
    # matches PyTorch's exact (erf-based) GELU to ~float32 precision.
    a1, a2, a3, a4, a5 = 0.254829592, -0.284496736, 1.421413741, -1.453152027, 1.061405429
    p = 0.3275911
    ax = jnp.abs(x)
    t = 1.0 / (1.0 + p * ax)
    poly = ((((a5 * t + a4) * t + a3) * t + a2) * t + a1) * t
    y = 1.0 - poly * jnp.exp(-ax * ax)
    return jnp.where(x >= 0, y, -y)


def _gelu(x):
    return 0.5 * x * (1.0 + _erf(x * _SQRT_HALF))


# ----------------------------- fused Pallas kernel -----------------------------

def _down_kernel(x_ref,
                 w1_ref, g1_ref, b1_ref,
                 w2_ref, g2_ref, b2_ref,
                 w3_ref, g3_ref, b3_ref,
                 w4_ref, g4_ref, b4_ref,
                 masks_ref, emb_ref,
                 o_ref,
                 vscr,
                 *, H2, W2, cin, cout):
    HW2 = H2 * W2
    Wfull = 2 * W2                                 # pre-pool image width

    # ---- fused MaxPool2d(2) + NCHW -> channels-first pooled map, all on-chip --------------
    xt = x_ref[...].T                              # (H*W, cin): one 2-D XLU transpose
    x4 = xt.reshape(H2, 2, Wfull, cin)             # split row pairs (minor dim untouched)
    vscr[...] = jnp.maximum(x4[:, 0], x4[:, 1]).reshape(2 * HW2, cin)   # vertical max
    pooled_cl = jnp.maximum(vscr[pl.ds(0, HW2, stride=2), :],           # horizontal max via
                            vscr[pl.ds(1, HW2, stride=2), :])           # stride-2 sublane reads
    pooled = pooled_cl.T                           # (cin, HW2) channels-first, f32

    # boundary masks (per-lane, broadcast over channel sublanes), f32 0/1
    mxl = masks_ref[0:1, :]                        # valid iff x-1 >= 0
    mxr = masks_ref[1:2, :]                        # valid iff x+1 <  W2
    myu = masks_ref[2:3, :]                        # valid iff y-1 >= 0
    myd = masks_ref[3:4, :]                        # valid iff y+1 <  H2

    def conv3x3(v, w_ref):
        # v: (ci, HW2) f32 channels-first.  Shifted taps via pltpu.roll along lanes + masks.
        # Any lane-wrap artifact of the rolls is always masked to zero.
        vl = pltpu.roll(v, shift=1, axis=1) * mxl              # left neighbour  (dx = -1)
        vr = pltpu.roll(v, shift=HW2 - 1, axis=1) * mxr        # right neighbour (dx = +1)
        slab = jnp.concatenate([vl, v, vr], axis=0)            # (3*ci, HW2): merged K = 3*ci
        up = pltpu.roll(slab, shift=W2, axis=1) * myu          # row above (ky = 0)
        dn = pltpu.roll(slab, shift=HW2 - W2, axis=1) * myd    # row below (ky = 2)
        acc = jnp.dot(w_ref[1], slab.astype(jnp.bfloat16),
                      preferred_element_type=jnp.float32)      # ky = 1 (init, no zero-fill)
        acc = acc + jnp.dot(w_ref[0], up.astype(jnp.bfloat16),
                            preferred_element_type=jnp.float32)
        acc = acc + jnp.dot(w_ref[2], dn.astype(jnp.bfloat16),
                            preferred_element_type=jnp.float32)
        return acc                                             # (co, HW2) f32

    def groupnorm1(y, g_ref, b_ref):
        # nn.GroupNorm(1, C): one-pass sum / sum-of-squares over the whole sample (f32).
        n = float(y.shape[0] * y.shape[1])
        s1 = jnp.sum(y)
        s2 = jnp.sum(y * y)
        mean = s1 / n
        var = s2 / n - mean * mean
        return (y - mean) * jax.lax.rsqrt(var + _GN_EPS) * g_ref[...] + b_ref[...]

    # DoubleConv #1 (cin -> cin, residual=True): gelu(x + GN(conv(gelu(GN(conv(x))))))
    a = _gelu(groupnorm1(conv3x3(pooled, w1_ref), g1_ref, b1_ref))
    a = groupnorm1(conv3x3(a, w2_ref), g2_ref, b2_ref)
    h = _gelu(pooled + a)

    # DoubleConv #2 (cin -> cout): GN(conv(gelu(GN(conv(x)))))
    a = _gelu(groupnorm1(conv3x3(h, w3_ref), g3_ref, b3_ref))
    a = groupnorm1(conv3x3(a, w4_ref), g4_ref, b4_ref)

    # Broadcast-add the (hoisted) time embedding; output is already channels-first (NCHW).
    o_ref[...] = (a + emb_ref[...]).astype(o_ref.dtype)        # (cout, HW2)


# ----------------------------- wrapper -----------------------------------------

def down_forward(params, x, t):
    """x: [B, Cin, H, W] (NCHW), t: [B, emb_dim] -> [B, Cout, H//2, W//2] (NCHW)."""
    B, Cin, H, W = x.shape
    assert H % 2 == 0 and W % 2 == 0 and W % 8 == 0
    x = x.astype(jnp.float32)
    t = t.astype(jnp.float32)
    H2, W2 = H // 2, W // 2
    HW2 = H2 * W2
    Cout = params["w4"].shape[1]

    # Pure view (no HBM pass): pooling + layout swizzle happen inside the kernel.
    xr = x.reshape(B, Cin, H * W)

    # Hoisted time-embedding branch: one batched matmul in plain XLA (f32).
    emb = (jax.nn.silu(t) @ params["emb_w"] + params["emb_b"])[:, :, None]   # (B, Cout, 1)

    # Per-lane boundary masks for the shifted conv taps.
    pcol = jnp.arange(HW2, dtype=jnp.int32) % W2
    prow = jnp.arange(HW2, dtype=jnp.int32) // W2
    masks = jnp.stack([pcol > 0, pcol < W2 - 1, prow > 0, prow < H2 - 1]).astype(jnp.float32)

    kernel = functools.partial(_down_kernel, H2=H2, W2=W2, cin=Cin, cout=Cout)

    def cspec(shape):
        zeros = (0,) * len(shape)
        return pl.BlockSpec(shape, lambda b, _z=zeros: _z)

    in_specs = [
        pl.BlockSpec((None, Cin, H * W), lambda b: (b, 0, 0)),               # x (per sample)
        cspec(params["w1"].shape), cspec(params["g1"].shape), cspec(params["b1"].shape),
        cspec(params["w2"].shape), cspec(params["g2"].shape), cspec(params["b2"].shape),
        cspec(params["w3"].shape), cspec(params["g3"].shape), cspec(params["b3"].shape),
        cspec(params["w4"].shape), cspec(params["g4"].shape), cspec(params["b4"].shape),
        cspec(masks.shape),
        pl.BlockSpec((None, Cout, 1), lambda b: (b, 0, 0)),                  # emb (per sample)
    ]

    # Explicit VMEM budget (review): input/output blocks (x2 buffers) + scratch + intermediates
    # + bf16 weights, with headroom; clamped to the v7x per-core capacity.
    est = (2 * Cin * H * W * 4
           + 2 * Cout * HW2 * 4
           + 2 * HW2 * Cin * 4
           + 12 * max(Cin, Cout) * HW2 * 4
           + 4 * (9 * Cin * Cin + 9 * Cin * Cin + 9 * Cin * Cout + 9 * Cout * Cout))
    vmem_limit = int(min(max(4 * est, 32 * 1024 * 1024), 64 * 1024 * 1024))

    out = pl.pallas_call(
        kernel,
        out_shape=jax.ShapeDtypeStruct((B, Cout, HW2), jnp.float32),
        grid=(B,),
        in_specs=in_specs,
        out_specs=pl.BlockSpec((None, Cout, HW2), lambda b: (b, 0, 0)),
        scratch_shapes=[pltpu.VMEM((2 * HW2, Cin), jnp.float32)],   # pooling decimation buffer
        compiler_params=pltpu.CompilerParams(
            dimension_semantics=("parallel",),
            vmem_limit_bytes=vmem_limit,
        ),
    )(xr,
      params["w1"], params["g1"], params["b1"],
      params["w2"], params["g2"], params["b2"],
      params["w3"], params["g3"], params["b3"],
      params["w4"], params["g4"], params["b4"],
      masks, emb)

    return out.reshape(B, Cout, H2, W2)                                      # free reshape


# ----------------------------- params & reference -------------------------------

def init_params(key, in_ch, out_ch, emb_dim):
    ks = jax.random.split(key, 10)

    def conv_w(k, cin, cout):
        # PyTorch conv weight [cout, cin, 3, 3] -> merged-row layout [3(ky), cout, 3(kx)*cin], bf16
        w = jax.random.normal(k, (cout, cin, 3, 3), jnp.float32) * 0.1
        return w.transpose(2, 0, 3, 1).reshape(3, cout, 3 * cin).astype(jnp.bfloat16)

    def gcol(k, c):
        return (1.0 + 0.1 * jax.random.normal(k, (c, 1), jnp.float32))

    def bcol(k, c):
        return 0.1 * jax.random.normal(k, (c, 1), jnp.float32)

    return {
        "w1": conv_w(ks[0], in_ch, in_ch), "g1": gcol(ks[4], in_ch), "b1": bcol(ks[5], in_ch),
        "w2": conv_w(ks[1], in_ch, in_ch), "g2": gcol(ks[6], in_ch), "b2": bcol(ks[7], in_ch),
        "w3": conv_w(ks[2], in_ch, out_ch), "g3": gcol(ks[8], out_ch), "b3": bcol(ks[9], out_ch),
        "w4": conv_w(ks[3], out_ch, out_ch),
        "g4": jnp.ones((out_ch, 1), jnp.float32), "b4": jnp.zeros((out_ch, 1), jnp.float32),
        # PyTorch Linear weight [out_ch, emb_dim] -> transposed for right-multiply
        "emb_w": (jax.random.normal(ks[4], (out_ch, emb_dim), jnp.float32) * 0.1).T,
        "emb_b": jax.random.normal(ks[5], (out_ch,), jnp.float32) * 0.1,
    }


def _ref_forward(params, x, t):
    # Plain-JAX reference of the PyTorch Down block.  Conv inputs/weights are rounded to bf16
    # (f32 accumulation) exactly as in the kernel; everything else stays f32.
    x = x.astype(jnp.float32)
    t = t.astype(jnp.float32)

    pooled = jax.lax.reduce_window(x, -jnp.inf, jax.lax.max,
                                   (1, 1, 2, 2), (1, 1, 2, 2), "VALID")

    def conv(z, wk):
        cout = wk.shape[1]
        cin = wk.shape[2] // 3
        w = wk.reshape(3, cout, 3, cin).transpose(1, 3, 0, 2)                # OIHW, bf16
        return jax.lax.conv_general_dilated(
            z.astype(jnp.bfloat16), w, (1, 1), ((1, 1), (1, 1)),
            dimension_numbers=("NCHW", "OIHW", "NCHW"),
            preferred_element_type=jnp.float32)

    def gn(z, g, b):
        m = jnp.mean(z, axis=(1, 2, 3), keepdims=True)
        v = jnp.mean(jnp.square(z - m), axis=(1, 2, 3), keepdims=True)
        return ((z - m) * jax.lax.rsqrt(v + _GN_EPS) * g.reshape(1, -1, 1, 1)
                + b.reshape(1, -1, 1, 1))

    gelu = lambda z: jax.nn.gelu(z, approximate=False)

    a = gelu(gn(conv(pooled, params["w1"]), params["g1"], params["b1"]))
    a = gn(conv(a, params["w2"]), params["g2"], params["b2"])
    h = gelu(pooled + a)
    a = gelu(gn(conv(h, params["w3"]), params["g3"], params["b3"]))
    a = gn(conv(a, params["w4"]), params["g4"], params["b4"])
    emb = jax.nn.silu(t) @ params["emb_w"] + params["emb_b"]
    return a + emb[:, :, None, None]


if __name__ == "__main__":
    key = jax.random.PRNGKey(0)
    k_x, k_t, k_p = jax.random.split(key, 3)

    B, Cin, H, W = 2, 4, 16, 16
    Cout, emb_dim = 8, 32

    x = jax.random.normal(k_x, (B, Cin, H, W), jnp.float32)
    t = jax.random.normal(k_t, (B, emb_dim), jnp.float32)
    params = init_params(k_p, Cin, Cout, emb_dim)

    fwd = jax.jit(functools.partial(down_forward, params))
    out = fwd(x, t)
    jax.block_until_ready(out)

    assert out.shape == (B, Cout, H // 2, W // 2), out.shape
    assert bool(jnp.all(jnp.isfinite(out)))
    ref = _ref_forward(params, x, t)
    err = float(jnp.max(jnp.abs(out - ref)))
    assert bool(jnp.allclose(out, ref, atol=1e-2, rtol=1e-2)), err
    print("KERNEL_OK")
</pallas_src>

<mosaic_0001>
module attributes {stable_mosaic.version = 11 : i64} {
  func.func @_down_kernel(%arg0: i32, %arg1: memref<1x4x256xf32, #tpu.memory_space<vmem>>, %arg2: memref<3x4x12xbf16, #tpu.memory_space<vmem>>, %arg3: memref<4x1xf32, #tpu.memory_space<vmem>>, %arg4: memref<4x1xf32, #tpu.memory_space<vmem>>, %arg5: memref<3x4x12xbf16, #tpu.memory_space<vmem>>, %arg6: memref<4x1xf32, #tpu.memory_space<vmem>>, %arg7: memref<4x1xf32, #tpu.memory_space<vmem>>, %arg8: memref<3x8x12xbf16, #tpu.memory_space<vmem>>, %arg9: memref<8x1xf32, #tpu.memory_space<vmem>>, %arg10: memref<8x1xf32, #tpu.memory_space<vmem>>, %arg11: memref<3x8x24xbf16, #tpu.memory_space<vmem>>, %arg12: memref<8x1xf32, #tpu.memory_space<vmem>>, %arg13: memref<8x1xf32, #tpu.memory_space<vmem>>, %arg14: memref<4x64xf32, #tpu.memory_space<vmem>>, %arg15: memref<1x8x1xf32, #tpu.memory_space<vmem>>, %arg16: memref<1x8x64xf32, #tpu.memory_space<vmem>>, %arg17: memref<128x4xf32, #tpu.memory_space<vmem>>) attributes {dimension_semantics = [#tpu.dimension_semantics<parallel>], iteration_bounds = array<i64: 2>, scalar_prefetch = 0 : i64, scratch_operands = 1 : i64, tpu.core_type = #tpu.core_type<tc>, window_params = [{transform_indices = @transform_0, window_bounds = array<i64: 1, 4, 256>}, {pipeline_mode = #tpu.pipeline_mode<synchronous>, transform_indices = @transform_1, window_bounds = array<i64: 3, 4, 12>}, {pipeline_mode = #tpu.pipeline_mode<synchronous>, transform_indices = @transform_2, window_bounds = array<i64: 4, 1>}, {pipeline_mode = #tpu.pipeline_mode<synchronous>, transform_indices = @transform_3, window_bounds = array<i64: 4, 1>}, {pipeline_mode = #tpu.pipeline_mode<synchronous>, transform_indices = @transform_4, window_bounds = array<i64: 3, 4, 12>}, {pipeline_mode = #tpu.pipeline_mode<synchronous>, transform_indices = @transform_5, window_bounds = array<i64: 4, 1>}, {pipeline_mode = #tpu.pipeline_mode<synchronous>, transform_indices = @transform_6, window_bounds = array<i64: 4, 1>}, {pipeline_mode = #tpu.pipeline_mode<synchronous>, transform_indices = @transform_7, window_bounds = array<i64: 3, 8, 12>}, {pipeline_mode = #tpu.pipeline_mode<synchronous>, transform_indices = @transform_8, window_bounds = array<i64: 8, 1>}, {pipeline_mode = #tpu.pipeline_mode<synchronous>, transform_indices = @transform_9, window_bounds = array<i64: 8, 1>}, {pipeline_mode = #tpu.pipeline_mode<synchronous>, transform_indices = @transform_10, window_bounds = array<i64: 3, 8, 24>}, {pipeline_mode = #tpu.pipeline_mode<synchronous>, transform_indices = @transform_11, window_bounds = array<i64: 8, 1>}, {pipeline_mode = #tpu.pipeline_mode<synchronous>, transform_indices = @transform_12, window_bounds = array<i64: 8, 1>}, {pipeline_mode = #tpu.pipeline_mode<synchronous>, transform_indices = @transform_13, window_bounds = array<i64: 4, 64>}, {transform_indices = @transform_14, window_bounds = array<i64: 1, 8, 1>}, {transform_indices = @transform_15, window_bounds = array<i64: 1, 8, 64>}]} {
    %c0 = arith.constant 0 : index
    %c0_0 = arith.constant 0 : index
    %c0_1 = arith.constant 0 : index
    %0 = vector.load %arg1[%c0, %c0_0, %c0_1] : memref<1x4x256xf32, #tpu.memory_space<vmem>>, vector<1x4x256xf32>
    %1 = vector.shape_cast %0 : vector<1x4x256xf32> to vector<4x256xf32>
    %2 = tpu.transpose %1, [1, 0] : vector<4x256xf32> -> vector<256x4xf32>
    %3 = vector.shape_cast %2 : vector<256x4xf32> to vector<8x2x16x4xf32>
    %4 = vector.extract_strided_slice %3 {offsets = [0, 0, 0, 0], sizes = [8, 1, 16, 4], strides = [1, 1, 1, 1]} : vector<8x2x16x4xf32> to vector<8x1x16x4xf32>
    %5 = vector.shape_cast %4 : vector<8x1x16x4xf32> to vector<8x16x4xf32>
    %6 = vector.extract_strided_slice %3 {offsets = [0, 1, 0, 0], sizes = [8, 1, 16, 4], strides = [1, 1, 1, 1]} : vector<8x2x16x4xf32> to vector<8x1x16x4xf32>
    %7 = vector.shape_cast %6 : vector<8x1x16x4xf32> to vector<8x16x4xf32>
    %8 = arith.maximumf %5, %7 : vector<8x16x4xf32>
    %9 = vector.shape_cast %8 : vector<8x16x4xf32> to vector<128x4xf32>
    %c0_2 = arith.constant 0 : index
    %c0_3 = arith.constant 0 : index
    %10 = vector.load %arg17[%c0_2, %c0_3] : memref<128x4xf32, #tpu.memory_space<vmem>>, vector<128x4xf32>
    tpu.vector_store %arg17[%c0_2, %c0_3], %9 {strides = array<i32>} : memref<128x4xf32, #tpu.memory_space<vmem>>, vector<128x4xf32>,
    %c0_4 = arith.constant 0 : index
    %c0_5 = arith.constant 0 : index
    %11 = tpu.strided_load %arg17[%c0_4, %c0_5] {strides = array<i32: 2, 1>} : memref<128x4xf32, #tpu.memory_space<vmem>>, vector<64x4xf32>
    %c1 = arith.constant 1 : index
    %c0_6 = arith.constant 0 : index
    %12 = tpu.strided_load %arg17[%c1, %c0_6] {strides = array<i32: 2, 1>} : memref<128x4xf32, #tpu.memory_space<vmem>>, vector<64x4xf32>
    %13 = arith.maximumf %11, %12 : vector<64x4xf32>
    %14 = tpu.transpose %13, [1, 0] : vector<64x4xf32> -> vector<4x64xf32>
    %c0_7 = arith.constant 0 : index
    %c0_8 = arith.constant 0 : index
    %15 = vector.load %arg14[%c0_7, %c0_8] : memref<4x64xf32, #tpu.memory_space<vmem>>, vector<1x64xf32>
    %c1_9 = arith.constant 1 : index
    %c0_10 = arith.constant 0 : index
    %16 = vector.load %arg14[%c1_9, %c0_10] : memref<4x64xf32, #tpu.memory_space<vmem>>, vector<1x64xf32>
    %c2 = arith.constant 2 : index
    %c0_11 = arith.constant 0 : index
    %17 = vector.load %arg14[%c2, %c0_11] : memref<4x64xf32, #tpu.memory_space<vmem>>, vector<1x64xf32>
    %c3 = arith.constant 3 : index
    %c0_12 = arith.constant 0 : index
    %18 = vector.load %arg14[%c3, %c0_12] : memref<4x64xf32, #tpu.memory_space<vmem>>, vector<1x64xf32>
    %c1_i32 = arith.constant 1 : i32
    %19 = tpu.dynamic_rotate %14 by %c1_i32 dim 1 : vector<4x64xf32>, i32 -> vector<4x64xf32>
    %20 = vector.broadcast %15 : vector<1x64xf32> to vector<4x64xf32>
    %21 = arith.mulf %19, %20 : vector<4x64xf32>
    %c63_i32 = arith.constant 63 : i32
    %22 = tpu.dynamic_rotate %14 by %c63_i32 dim 1 : vector<4x64xf32>, i32 -> vector<4x64xf32>
    %23 = vector.broadcast %16 : vector<1x64xf32> to vector<4x64xf32>
    %24 = arith.mulf %22, %23 : vector<4x64xf32>
    %25 = tpu.concatenate %21, %14, %24 in 0 : vector<4x64xf32>, vector<4x64xf32>, vector<4x64xf32> -> vector<12x64xf32>
    %c8_i32 = arith.constant 8 : i32
    %26 = tpu.dynamic_rotate %25 by %c8_i32 dim 1 : vector<12x64xf32>, i32 -> vector<12x64xf32>
    %27 = vector.broadcast %17 : vector<1x64xf32> to vector<12x64xf32>
    %28 = arith.mulf %26, %27 : vector<12x64xf32>
    %c56_i32 = arith.constant 56 : i32
    %29 = tpu.dynamic_rotate %25 by %c56_i32 dim 1 : vector<12x64xf32>, i32 -> vector<12x64xf32>
    %30 = vector.broadcast %18 : vector<1x64xf32> to vector<12x64xf32>
    %31 = arith.mulf %29, %30 : vector<12x64xf32>
    %c1_13 = arith.constant 1 : index
    %c0_14 = arith.constant 0 : index
    %c0_15 = arith.constant 0 : index
    %32 = vector.load %arg2[%c1_13, %c0_14, %c0_15] : memref<3x4x12xbf16, #tpu.memory_space<vmem>>, vector<1x4x12xbf16>
    %33 = vector.shape_cast %32 : vector<1x4x12xbf16> to vector<4x12xbf16>
    %34 = arith.truncf %25 : vector<12x64xf32> to vector<12x64xbf16>
    %cst = arith.constant dense<0.000000e+00> : vector<4x64xf32>
    %35 = tpu.matmul %33, %34, %cst {dimension_numbers = #tpu.dot_dimension_numbers<[1], [0], [0], [1], [0, 0, 1, 1], [], []>} : vector<4x12xbf16>, vector<12x64xbf16>, vector<4x64xf32> -> vector<4x64xf32>
    %c0_16 = arith.constant 0 : index
    %c0_17 = arith.constant 0 : index
    %c0_18 = arith.constant 0 : index
    %36 = vector.load %arg2[%c0_16, %c0_17, %c0_18] : memref<3x4x12xbf16, #tpu.memory_space<vmem>>, vector<1x4x12xbf16>
    %37 = vector.shape_cast %36 : vector<1x4x12xbf16> to vector<4x12xbf16>
    %38 = arith.truncf %28 : vector<12x64xf32> to vector<12x64xbf16>
    %cst_19 = arith.constant dense<0.000000e+00> : vector<4x64xf32>
    %39 = tpu.matmul %37, %38, %cst_19 {dimension_numbers = #tpu.dot_dimension_numbers<[1], [0], [0], [1], [0, 0, 1, 1], [], []>} : vector<4x12xbf16>, vector<12x64xbf16>, vector<4x64xf32> -> vector<4x64xf32>
    %40 = arith.addf %35, %39 : vector<4x64xf32>
    %c2_20 = arith.constant 2 : index
    %c0_21 = arith.constant 0 : index
    %c0_22 = arith.constant 0 : index
    %41 = vector.load %arg2[%c2_20, %c0_21, %c0_22] : memref<3x4x12xbf16, #tpu.memory_space<vmem>>, vector<1x4x12xbf16>
    %42 = vector.shape_cast %41 : vector<1x4x12xbf16> to vector<4x12xbf16>
    %43 = arith.truncf %31 : vector<12x64xf32> to vector<12x64xbf16>
    %cst_23 = arith.constant dense<0.000000e+00> : vector<4x64xf32>
    %44 = tpu.matmul %42, %43, %cst_23 {dimension_numbers = #tpu.dot_dimension_numbers<[1], [0], [0], [1], [0, 0, 1, 1], [], []>} : vector<4x12xbf16>, vector<12x64xbf16>, vector<4x64xf32> -> vector<4x64xf32>
    %45 = arith.addf %40, %44 : vector<4x64xf32>
    %46 = vector.shape_cast %45 : vector<4x64xf32> to vector<1x4x64xf32>
    %cst_24 = arith.constant dense<0.000000e+00> : vector<1xf32>
    %47 = vector.multi_reduction <add>, %46, %cst_24 [1, 2] : vector<1x4x64xf32> to vector<1xf32>
    %48 = vector.shape_cast %47 : vector<1xf32> to vector<1x1x1xf32>
    %49 = vector.extract %48[0, 0, 0] : f32 from vector<1x1x1xf32>
    %50 = arith.mulf %45, %45 : vector<4x64xf32>
    %51 = vector.shape_cast %50 : vector<4x64xf32> to vector<1x4x64xf32>
    %cst_25 = arith.constant dense<0.000000e+00> : vector<1xf32>
    %52 = vector.multi_reduction <add>, %51, %cst_25 [1, 2] : vector<1x4x64xf32> to vector<1xf32>
    %53 = vector.shape_cast %52 : vector<1xf32> to vector<1x1x1xf32>
    %54 = vector.extract %53[0, 0, 0] : f32 from vector<1x1x1xf32>
    %cst_26 = arith.constant 2.560000e+02 : f32
    %55 = arith.divf %49, %cst_26 : f32
    %cst_27 = arith.constant 2.560000e+02 : f32
    %56 = arith.divf %54, %cst_27 : f32
    %57 = arith.mulf %55, %55 : f32
    %58 = arith.subf %56, %57 : f32
    %59 = vector.broadcast %55 : f32 to vector<4x64xf32>
    %60 = arith.subf %45, %59 : vector<4x64xf32>
    %cst_28 = arith.constant 9.99999974E-6 : f32
    %61 = arith.addf %58, %cst_28 : f32
    %62 = math.rsqrt %61 : f32
    %63 = vector.broadcast %62 : f32 to vector<4x64xf32>
    %64 = arith.mulf %60, %63 : vector<4x64xf32>
    %c0_29 = arith.constant 0 : index
    %c0_30 = arith.constant 0 : index
    %65 = vector.load %arg3[%c0_29, %c0_30] : memref<4x1xf32, #tpu.memory_space<vmem>>, vector<4x1xf32>
    %66 = vector.broadcast %65 : vector<4x1xf32> to vector<4x64xf32>
    %67 = arith.mulf %64, %66 : vector<4x64xf32>
    %c0_31 = arith.constant 0 : index
    %c0_32 = arith.constant 0 : index
    %68 = vector.load %arg4[%c0_31, %c0_32] : memref<4x1xf32, #tpu.memory_space<vmem>>, vector<4x1xf32>
    %69 = vector.broadcast %68 : vector<4x1xf32> to vector<4x64xf32>
    %70 = arith.addf %67, %69 : vector<4x64xf32>
    %cst_33 = arith.constant 5.000000e-01 : f32
    %71 = vector.broadcast %cst_33 : f32 to vector<4x64xf32>
    %72 = arith.mulf %71, %70 : vector<4x64xf32>
    %cst_34 = arith.constant 0.707106769 : f32
    %73 = vector.broadcast %cst_34 : f32 to vector<4x64xf32>
    %74 = arith.mulf %70, %73 : vector<4x64xf32>
    %75 = math.absf %74 : vector<4x64xf32>
    %cst_35 = arith.constant 0.327591091 : f32
    %76 = vector.broadcast %cst_35 : f32 to vector<4x64xf32>
    %77 = arith.mulf %76, %75 : vector<4x64xf32>
    %cst_36 = arith.constant 1.000000e+00 : f32
    %78 = vector.broadcast %cst_36 : f32 to vector<4x64xf32>
    %79 = arith.addf %78, %77 : vector<4x64xf32>
    %cst_37 = arith.constant 1.000000e+00 : f32
    %80 = vector.broadcast %cst_37 : f32 to vector<4x64xf32>
    %81 = arith.divf %80, %79 : vector<4x64xf32>
    %cst_38 = arith.constant 1.06140542 : f32
    %82 = vector.broadcast %cst_38 : f32 to vector<4x64xf32>
    %83 = arith.mulf %82, %81 : vector<4x64xf32>
    %cst_39 = arith.constant -1.45315206 : f32
    %84 = vector.broadcast %cst_39 : f32 to vector<4x64xf32>
    %85 = arith.addf %83, %84 : vector<4x64xf32>
    %86 = arith.mulf %85, %81 : vector<4x64xf32>
    %cst_40 = arith.constant 1.42141378 : f32
    %87 = vector.broadcast %cst_40 : f32 to vector<4x64xf32>
    %88 = arith.addf %86, %87 : vector<4x64xf32>
    %89 = arith.mulf %88, %81 : vector<4x64xf32>
    %cst_41 = arith.constant -0.284496725 : f32
    %90 = vector.broadcast %cst_41 : f32 to vector<4x64xf32>
    %91 = arith.addf %89, %90 : vector<4x64xf32>
    %92 = arith.mulf %91, %81 : vector<4x64xf32>
    %cst_42 = arith.constant 0.254829586 : f32
    %93 = vector.broadcast %cst_42 : f32 to vector<4x64xf32>
    %94 = arith.addf %92, %93 : vector<4x64xf32>
    %95 = arith.mulf %94, %81 : vector<4x64xf32>
    %cst_43 = arith.constant 0.000000e+00 : f32
    %96 = vector.broadcast %cst_43 : f32 to vector<4x64xf32>
    %97 = arith.subf %96, %75 : vector<4x64xf32>
    %98 = arith.mulf %97, %75 : vector<4x64xf32>
    %99 = math.exp %98 : vector<4x64xf32>
    %100 = arith.mulf %95, %99 : vector<4x64xf32>
    %cst_44 = arith.constant 1.000000e+00 : f32
    %101 = vector.broadcast %cst_44 : f32 to vector<4x64xf32>
    %102 = arith.subf %101, %100 : vector<4x64xf32>
    %cst_45 = arith.constant 0.000000e+00 : f32
    %103 = vector.broadcast %cst_45 : f32 to vector<4x64xf32>
    %104 = arith.cmpf oge, %74, %103 : vector<4x64xf32>
    %cst_46 = arith.constant 0.000000e+00 : f32
    %105 = vector.broadcast %cst_46 : f32 to vector<4x64xf32>
    %106 = arith.subf %105, %102 : vector<4x64xf32>
    %107 = arith.select %104, %102, %106 : vector<4x64xi1>, vector<4x64xf32>
    %cst_47 = arith.constant 1.000000e+00 : f32
    %108 = vector.broadcast %cst_47 : f32 to vector<4x64xf32>
    %109 = arith.addf %108, %107 : vector<4x64xf32>
    %110 = arith.mulf %72, %109 : vector<4x64xf32>
    %c1_i32_48 = arith.constant 1 : i32
    %111 = tpu.dynamic_rotate %110 by %c1_i32_48 dim 1 : vector<4x64xf32>, i32 -> vector<4x64xf32>
    %112 = vector.broadcast %15 : vector<1x64xf32> to vector<4x64xf32>
    %113 = arith.mulf %111, %112 : vector<4x64xf32>
    %c63_i32_49 = arith.constant 63 : i32
    %114 = tpu.dynamic_rotate %110 by %c63_i32_49 dim 1 : vector<4x64xf32>, i32 -> vector<4x64xf32>
    %115 = vector.broadcast %16 : vector<1x64xf32> to vector<4x64xf32>
    %116 = arith.mulf %114, %115 : vector<4x64xf32>
    %117 = tpu.concatenate %113, %110, %116 in 0 : vector<4x64xf32>, vector<4x64xf32>, vector<4x64xf32> -> vector<12x64xf32>
    %c8_i32_50 = arith.constant 8 : i32
    %118 = tpu.dynamic_rotate %117 by %c8_i32_50 dim 1 : vector<12x64xf32>, i32 -> vector<12x64xf32>
    %119 = vector.broadcast %17 : vector<1x64xf32> to vector<12x64xf32>
    %120 = arith.mulf %118, %119 : vector<12x64xf32>
    %c56_i32_51 = arith.constant 56 : i32
    %121 = tpu.dynamic_rotate %117 by %c56_i32_51 dim 1 : vector<12x64xf32>, i32 -> vector<12x64xf32>
    %122 = vector.broadcast %18 : vector<1x64xf32> to vector<12x64xf32>
    %123 = arith.mulf %121, %122 : vector<12x64xf32>
    %c1_52 = arith.constant 1 : index
    %c0_53 = arith.constant 0 : index
    %c0_54 = arith.constant 0 : index
    %124 = vector.load %arg5[%c1_52, %c0_53, %c0_54] : memref<3x4x12xbf16, #tpu.memory_space<vmem>>, vector<1x4x12xbf16>
    %125 = vector.shape_cast %124 : vector<1x4x12xbf16> to vector<4x12xbf16>
    %126 = arith.truncf %117 : vector<12x64xf32> to vector<12x64xbf16>
    %cst_55 = arith.constant dense<0.000000e+00> : vector<4x64xf32>
    %127 = tpu.matmul %125, %126, %cst_55 {dimension_numbers = #tpu.dot_dimension_numbers<[1], [0], [0], [1], [0, 0, 1, 1], [], []>} : vector<4x12xbf16>, vector<12x64xbf16>, vector<4x64xf32> -> vector<4x64xf32>
    %c0_56 = arith.constant 0 : index
    %c0_57 = arith.constant 0 : index
    %c0_58 = arith.constant 0 : index
    %128 = vector.load %arg5[%c0_56, %c0_57, %c0_58] : memref<3x4x12xbf16, #tpu.memory_space<vmem>>, vector<1x4x12xbf16>
    %129 = vector.shape_cast %128 : vector<1x4x12xbf16> to vector<4x12xbf16>
    %130 = arith.truncf %120 : vector<12x64xf32> to vector<12x64xbf16>
    %cst_59 = arith.constant dense<0.000000e+00> : vector<4x64xf32>
    %131 = tpu.matmul %129, %130, %cst_59 {dimension_numbers = #tpu.dot_dimension_numbers<[1], [0], [0], [1], [0, 0, 1, 1], [], []>} : vector<4x12xbf16>, vector<12x64xbf16>, vector<4x64xf32> -> vector<4x64xf32>
    %132 = arith.addf %127, %131 : vector<4x64xf32>
    %c2_60 = arith.constant 2 : index
    %c0_61 = arith.constant 0 : index
    %c0_62 = arith.constant 0 : index
    %133 = vector.load %arg5[%c2_60, %c0_61, %c0_62] : memref<3x4x12xbf16, #tpu.memory_space<vmem>>, vector<1x4x12xbf16>
    %134 = vector.shape_cast %133 : vector<1x4x12xbf16> to vector<4x12xbf16>
    %135 = arith.truncf %123 : vector<12x64xf32> to vector<12x64xbf16>
    %cst_63 = arith.constant dense<0.000000e+00> : vector<4x64xf32>
    %136 = tpu.matmul %134, %135, %cst_63 {dimension_numbers = #tpu.dot_dimension_numbers<[1], [0], [0], [1], [0, 0, 1, 1], [], []>} : vector<4x12xbf16>, vector<12x64xbf16>, vector<4x64xf32> -> vector<4x64xf32>
    %137 = arith.addf %132, %136 : vector<4x64xf32>
    %138 = vector.shape_cast %137 : vector<4x64xf32> to vector<1x4x64xf32>
    %cst_64 = arith.constant dense<0.000000e+00> : vector<1xf32>
    %139 = vector.multi_reduction <add>, %138, %cst_64 [1, 2] : vector<1x4x64xf32> to vector<1xf32>
    %140 = vector.shape_cast %139 : vector<1xf32> to vector<1x1x1xf32>
    %141 = vector.extract %140[0, 0, 0] : f32 from vector<1x1x1xf32>
    %142 = arith.mulf %137, %137 : vector<4x64xf32>
    %143 = vector.shape_cast %142 : vector<4x64xf32> to vector<1x4x64xf32>
    %cst_65 = arith.constant dense<0.000000e+00> : vector<1xf32>
    %144 = vector.multi_reduction <add>, %143, %cst_65 [1, 2] : vector<1x4x64xf32> to vector<1xf32>
    %145 = vector.shape_cast %144 : vector<1xf32> to vector<1x1x1xf32>
    %146 = vector.extract %145[0, 0, 0] : f32 from vector<1x1x1xf32>
    %cst_66 = arith.constant 2.560000e+02 : f32
    %147 = arith.divf %141, %cst_66 : f32
    %cst_67 = arith.constant 2.560000e+02 : f32
    %148 = arith.divf %146, %cst_67 : f32
    %149 = arith.mulf %147, %147 : f32
    %150 = arith.subf %148, %149 : f32
    %151 = vector.broadcast %147 : f32 to vector<4x64xf32>
    %152 = arith.subf %137, %151 : vector<4x64xf32>
    %cst_68 = arith.constant 9.99999974E-6 : f32
    %153 = arith.addf %150, %cst_68 : f32
    %154 = math.rsqrt %153 : f32
    %155 = vector.broadcast %154 : f32 to vector<4x64xf32>
    %156 = arith.mulf %152, %155 : vector<4x64xf32>
    %c0_69 = arith.constant 0 : index
    %c0_70 = arith.constant 0 : index
    %157 = vector.load %arg6[%c0_69, %c0_70] : memref<4x1xf32, #tpu.memory_space<vmem>>, vector<4x1xf32>
    %158 = vector.broadcast %157 : vector<4x1xf32> to vector<4x64xf32>
    %159 = arith.mulf %156, %158 : vector<4x64xf32>
    %c0_71 = arith.constant 0 : index
    %c0_72 = arith.constant 0 : index
    %160 = vector.load %arg7[%c0_71, %c0_72] : memref<4x1xf32, #tpu.memory_space<vmem>>, vector<4x1xf32>
    %161 = vector.broadcast %160 : vector<4x1xf32> to vector<4x64xf32>
    %162 = arith.addf %159, %161 : vector<4x64xf32>
    %163 = arith.addf %14, %162 : vector<4x64xf32>
    %cst_73 = arith.constant 5.000000e-01 : f32
    %164 = vector.broadcast %cst_73 : f32 to vector<4x64xf32>
    %165 = arith.mulf %164, %163 : vector<4x64xf32>
    %cst_74 = arith.constant 0.707106769 : f32
    %166 = vector.broadcast %cst_74 : f32 to vector<4x64xf32>
    %167 = arith.mulf %163, %166 : vector<4x64xf32>
    %168 = math.absf %167 : vector<4x64xf32>
    %cst_75 = arith.constant 0.327591091 : f32
    %169 = vector.broadcast %cst_75 : f32 to vector<4x64xf32>
    %170 = arith.mulf %169, %168 : vector<4x64xf32>
    %cst_76 = arith.constant 1.000000e+00 : f32
    %171 = vector.broadcast %cst_76 : f32 to vector<4x64xf32>
    %172 = arith.addf %171, %170 : vector<4x64xf32>
    %cst_77 = arith.constant 1.000000e+00 : f32
    %173 = vector.broadcast %cst_77 : f32 to vector<4x64xf32>
    %174 = arith.divf %173, %172 : vector<4x64xf32>
    %cst_78 = arith.constant 1.06140542 : f32
    %175 = vector.broadcast %cst_78 : f32 to vector<4x64xf32>
    %176 = arith.mulf %175, %174 : vector<4x64xf32>
    %cst_79 = arith.constant -1.45315206 : f32
    %177 = vector.broadcast %cst_79 : f32 to vector<4x64xf32>
    %178 = arith.addf %176, %177 : vector<4x64xf32>
    %179 = arith.mulf %178, %174 : vector<4x64xf32>
    %cst_80 = arith.constant 1.42141378 : f32
    %180 = vector.broadcast %cst_80 : f32 to vector<4x64xf32>
    %181 = arith.addf %179, %180 : vector<4x64xf32>
    %182 = arith.mulf %181, %174 : vector<4x64xf32>
    %cst_81 = arith.constant -0.284496725 : f32
    %183 = vector.broadcast %cst_81 : f32 to vector<4x64xf32>
    %184 = arith.addf %182, %183 : vector<4x64xf32>
    %185 = arith.mulf %184, %174 : vector<4x64xf32>
    %cst_82 = arith.constant 0.254829586 : f32
    %186 = vector.broadcast %cst_82 : f32 to vector<4x64xf32>
    %187 = arith.addf %185, %186 : vector<4x64xf32>
    %188 = arith.mulf %187, %174 : vector<4x64xf32>
    %cst_83 = arith.constant 0.000000e+00 : f32
    %189 = vector.broadcast %cst_83 : f32 to vector<4x64xf32>
    %190 = arith.subf %189, %168 : vector<4x64xf32>
    %191 = arith.mulf %190, %168 : vector<4x64xf32>
    %192 = math.exp %191 : vector<4x64xf32>
    %193 = arith.mulf %188, %192 : vector<4x64xf32>
    %cst_84 = arith.constant 1.000000e+00 : f32
    %194 = vector.broadcast %cst_84 : f32 to vector<4x64xf32>
    %195 = arith.subf %194, %193 : vector<4x64xf32>
    %cst_85 = arith.constant 0.000000e+00 : f32
    %196 = vector.broadcast %cst_85 : f32 to vector<4x64xf32>
    %197 = arith.cmpf oge, %167, %196 : vector<4x64xf32>
    %cst_86 = arith.constant 0.000000e+00 : f32
    %198 = vector.broadcast %cst_86 : f32 to vector<4x64xf32>
    %199 = arith.subf %198, %195 : vector<4x64xf32>
    %200 = arith.select %197, %195, %199 : vector<4x64xi1>, vector<4x64xf32>
    %cst_87 = arith.constant 1.000000e+00 : f32
    %201 = vector.broadcast %cst_87 : f32 to vector<4x64xf32>
    %202 = arith.addf %201, %200 : vector<4x64xf32>
    %203 = arith.mulf %165, %202 : vector<4x64xf32>
    %c1_i32_88 = arith.constant 1 : i32
    %204 = tpu.dynamic_rotate %203 by %c1_i32_88 dim 1 : vector<4x64xf32>, i32 -> vector<4x64xf32>
    %205 = vector.broadcast %15 : vector<1x64xf32> to vector<4x64xf32>
    %206 = arith.mulf %204, %205 : vector<4x64xf32>
    %c63_i32_89 = arith.constant 63 : i32
    %207 = tpu.dynamic_rotate %203 by %c63_i32_89 dim 1 : vector<4x64xf32>, i32 -> vector<4x64xf32>
    %208 = vector.broadcast %16 : vector<1x64xf32> to vector<4x64xf32>
    %209 = arith.mulf %207, %208 : vector<4x64xf32>
    %210 = tpu.concatenate %206, %203, %209 in 0 : vector<4x64xf32>, vector<4x64xf32>, vector<4x64xf32> -> vector<12x64xf32>
    %c8_i32_90 = arith.constant 8 : i32
    %211 = tpu.dynamic_rotate %210 by %c8_i32_90 dim 1 : vector<12x64xf32>, i32 -> vector<12x64xf32>
    %212 = vector.broadcast %17 : vector<1x64xf32> to vector<12x64xf32>
    %213 = arith.mulf %211, %212 : vector<12x64xf32>
    %c56_i32_91 = arith.constant 56 : i32
    %214 = tpu.dynamic_rotate %210 by %c56_i32_91 dim 1 : vector<12x64xf32>, i32 -> vector<12x64xf32>
    %215 = vector.broadcast %18 : vector<1x64xf32> to vector<12x64xf32>
    %216 = arith.mulf %214, %215 : vector<12x64xf32>
    %c1_92 = arith.constant 1 : index
    %c0_93 = arith.constant 0 : index
    %c0_94 = arith.constant 0 : index
    %217 = vector.load %arg8[%c1_92, %c0_93, %c0_94] : memref<3x8x12xbf16, #tpu.memory_space<vmem>>, vector<1x8x12xbf16>
    %218 = vector.shape_cast %217 : vector<1x8x12xbf16> to vector<8x12xbf16>
    %219 = arith.truncf %210 : vector<12x64xf32> to vector<12x64xbf16>
    %cst_95 = arith.constant dense<0.000000e+00> : vector<8x64xf32>
    %220 = tpu.matmul %218, %219, %cst_95 {dimension_numbers = #tpu.dot_dimension_numbers<[1], [0], [0], [1], [0, 0, 1, 1], [], []>} : vector<8x12xbf16>, vector<12x64xbf16>, vector<8x64xf32> -> vector<8x64xf32>
    %c0_96 = arith.constant 0 : index
    %c0_97 = arith.constant 0 : index
    %c0_98 = arith.constant 0 : index
    %221 = vector.load %arg8[%c0_96, %c0_97, %c0_98] : memref<3x8x12xbf16, #tpu.memory_space<vmem>>, vector<1x8x12xbf16>
    %222 = vector.shape_cast %221 : vector<1x8x12xbf16> to vector<8x12xbf16>
    %223 = arith.truncf %213 : vector<12x64xf32> to vector<12x64xbf16>
    %cst_99 = arith.constant dense<0.000000e+00> : vector<8x64xf32>
    %224 = tpu.matmul %222, %223, %cst_99 {dimension_numbers = #tpu.dot_dimension_numbers<[1], [0], [0], [1], [0, 0, 1, 1], [], []>} : vector<8x12xbf16>, vector<12x64xbf16>, vector<8x64xf32> -> vector<8x64xf32>
    %225 = arith.addf %220, %224 : vector<8x64xf32>
    %c2_100 = arith.constant 2 : index
    %c0_101 = arith.constant 0 : index
    %c0_102 = arith.constant 0 : index
    %226 = vector.load %arg8[%c2_100, %c0_101, %c0_102] : memref<3x8x12xbf16, #tpu.memory_space<vmem>>, vector<1x8x12xbf16>
    %227 = vector.shape_cast %226 : vector<1x8x12xbf16> to vector<8x12xbf16>
    %228 = arith.truncf %216 : vector<12x64xf32> to vector<12x64xbf16>
    %cst_103 = arith.constant dense<0.000000e+00> : vector<8x64xf32>
    %229 = tpu.matmul %227, %228, %cst_103 {dimension_numbers = #tpu.dot_dimension_numbers<[1], [0], [0], [1], [0, 0, 1, 1], [], []>} : vector<8x12xbf16>, vector<12x64xbf16>, vector<8x64xf32> -> vector<8x64xf32>
    %230 = arith.addf %225, %229 : vector<8x64xf32>
    %231 = vector.shape_cast %230 : vector<8x64xf32> to vector<1x8x64xf32>
    %cst_104 = arith.constant dense<0.000000e+00> : vector<1xf32>
    %232 = vector.multi_reduction <add>, %231, %cst_104 [1, 2] : vector<1x8x64xf32> to vector<1xf32>
    %233 = vector.shape_cast %232 : vector<1xf32> to vector<1x1x1xf32>
    %234 = vector.extract %233[0, 0, 0] : f32 from vector<1x1x1xf32>
    %235 = arith.mulf %230, %230 : vector<8x64xf32>
    %236 = vector.shape_cast %235 : vector<8x64xf32> to vector<1x8x64xf32>
    %cst_105 = arith.constant dense<0.000000e+00> : vector<1xf32>
    %237 = vector.multi_reduction <add>, %236, %cst_105 [1, 2] : vector<1x8x64xf32> to vector<1xf32>
    %238 = vector.shape_cast %237 : vector<1xf32> to vector<1x1x1xf32>
    %239 = vector.extract %238[0, 0, 0] : f32 from vector<1x1x1xf32>
    %cst_106 = arith.constant 5.120000e+02 : f32
    %240 = arith.divf %234, %cst_106 : f32
    %cst_107 = arith.constant 5.120000e+02 : f32
    %241 = arith.divf %239, %cst_107 : f32
    %242 = arith.mulf %240, %240 : f32
    %243 = arith.subf %241, %242 : f32
    %244 = vector.broadcast %240 : f32 to vector<8x64xf32>
    %245 = arith.subf %230, %244 : vector<8x64xf32>
    %cst_108 = arith.constant 9.99999974E-6 : f32
    %246 = arith.addf %243, %cst_108 : f32
    %247 = math.rsqrt %246 : f32
    %248 = vector.broadcast %247 : f32 to vector<8x64xf32>
    %249 = arith.mulf %245, %248 : vector<8x64xf32>
    %c0_109 = arith.constant 0 : index
    %c0_110 = arith.constant 0 : index
    %250 = vector.load %arg9[%c0_109, %c0_110] : memref<8x1xf32, #tpu.memory_space<vmem>>, vector<8x1xf32>
    %251 = vector.broadcast %250 : vector<8x1xf32> to vector<8x64xf32>
    %252 = arith.mulf %249, %251 : vector<8x64xf32>
    %c0_111 = arith.constant 0 : index
    %c0_112 = arith.constant 0 : index
    %253 = vector.load %arg10[%c0_111, %c0_112] : memref<8x1xf32, #tpu.memory_space<vmem>>, vector<8x1xf32>
    %254 = vector.broadcast %253 : vector<8x1xf32> to vector<8x64xf32>
    %255 = arith.addf %252, %254 : vector<8x64xf32>
    %cst_113 = arith.constant 5.000000e-01 : f32
    %256 = vector.broadcast %cst_113 : f32 to vector<8x64xf32>
    %257 = arith.mulf %256, %255 : vector<8x64xf32>
    %cst_114 = arith.constant 0.707106769 : f32
    %258 = vector.broadcast %cst_114 : f32 to vector<8x64xf32>
    %259 = arith.mulf %255, %258 : vector<8x64xf32>
    %260 = math.absf %259 : vector<8x64xf32>
    %cst_115 = arith.constant 0.327591091 : f32
    %261 = vector.broadcast %cst_115 : f32 to vector<8x64xf32>
    %262 = arith.mulf %261, %260 : vector<8x64xf32>
    %cst_116 = arith.constant 1.000000e+00 : f32
    %263 = vector.broadcast %cst_116 : f32 to vector<8x64xf32>
    %264 = arith.addf %263, %262 : vector<8x64xf32>
    %cst_117 = arith.constant 1.000000e+00 : f32
    %265 = vector.broadcast %cst_117 : f32 to vector<8x64xf32>
    %266 = arith.divf %265, %264 : vector<8x64xf32>
    %cst_118 = arith.constant 1.06140542 : f32
    %267 = vector.broadcast %cst_118 : f32 to vector<8x64xf32>
    %268 = arith.mulf %267, %266 : vector<8x64xf32>
    %cst_119 = arith.constant -1.45315206 : f32
    %269 = vector.broadcast %cst_119 : f32 to vector<8x64xf32>
    %270 = arith.addf %268, %269 : vector<8x64xf32>
    %271 = arith.mulf %270, %266 : vector<8x64xf32>
    %cst_120 = arith.constant 1.42141378 : f32
    %272 = vector.broadcast %cst_120 : f32 to vector<8x64xf32>
    %273 = arith.addf %271, %272 : vector<8x64xf32>
    %274 = arith.mulf %273, %266 : vector<8x64xf32>
    %cst_121 = arith.constant -0.284496725 : f32
    %275 = vector.broadcast %cst_121 : f32 to vector<8x64xf32>
    %276 = arith.addf %274, %275 : vector<8x64xf32>
    %277 = arith.mulf %276, %266 : vector<8x64xf32>
    %cst_122 = arith.constant 0.254829586 : f32
    %278 = vector.broadcast %cst_122 : f32 to vector<8x64xf32>
    %279 = arith.addf %277, %278 : vector<8x64xf32>
    %280 = arith.mulf %279, %266 : vector<8x64xf32>
    %cst_123 = arith.constant 0.000000e+00 : f32
    %281 = vector.broadcast %cst_123 : f32 to vector<8x64xf32>
    %282 = arith.subf %281, %260 : vector<8x64xf32>
    %283 = arith.mulf %282, %260 : vector<8x64xf32>
    %284 = math.exp %283 : vector<8x64xf32>
    %285 = arith.mulf %280, %284 : vector<8x64xf32>
    %cst_124 = arith.constant 1.000000e+00 : f32
    %286 = vector.broadcast %cst_124 : f32 to vector<8x64xf32>
    %287 = arith.subf %286, %285 : vector<8x64xf32>
    %cst_125 = arith.constant 0.000000e+00 : f32
    %288 = vector.broadcast %cst_125 : f32 to vector<8x64xf32>
    %289 = arith.cmpf oge, %259, %288 : vector<8x64xf32>
    %cst_126 = arith.constant 0.000000e+00 : f32
    %290 = vector.broadcast %cst_126 : f32 to vector<8x64xf32>
    %291 = arith.subf %290, %287 : vector<8x64xf32>
    %292 = arith.select %289, %287, %291 : vector<8x64xi1>, vector<8x64xf32>
    %cst_127 = arith.constant 1.000000e+00 : f32
    %293 = vector.broadcast %cst_127 : f32 to vector<8x64xf32>
    %294 = arith.addf %293, %292 : vector<8x64xf32>
    %295 = arith.mulf %257, %294 : vector<8x64xf32>
    %c1_i32_128 = arith.constant 1 : i32
    %296 = tpu.dynamic_rotate %295 by %c1_i32_128 dim 1 : vector<8x64xf32>, i32 -> vector<8x64xf32>
    %297 = vector.broadcast %15 : vector<1x64xf32> to vector<8x64xf32>
    %298 = arith.mulf %296, %297 : vector<8x64xf32>
    %c63_i32_129 = arith.constant 63 : i32
    %299 = tpu.dynamic_rotate %295 by %c63_i32_129 dim 1 : vector<8x64xf32>, i32 -> vector<8x64xf32>
    %300 = vector.broadcast %16 : vector<1x64xf32> to vector<8x64xf32>
    %301 = arith.mulf %299, %300 : vector<8x64xf32>
    %302 = tpu.concatenate %298, %295, %301 in 0 : vector<8x64xf32>, vector<8x64xf32>, vector<8x64xf32> -> vector<24x64xf32>
    %c8_i32_130 = arith.constant 8 : i32
    %303 = tpu.dynamic_rotate %302 by %c8_i32_130 dim 1 : vector<24x64xf32>, i32 -> vector<24x64xf32>
    %304 = vector.broadcast %17 : vector<1x64xf32> to vector<24x64xf32>
    %305 = arith.mulf %303, %304 : vector<24x64xf32>
    %c56_i32_131 = arith.constant 56 : i32
    %306 = tpu.dynamic_rotate %302 by %c56_i32_131 dim 1 : vector<24x64xf32>, i32 -> vector<24x64xf32>
    %307 = vector.broadcast %18 : vector<1x64xf32> to vector<24x64xf32>
    %308 = arith.mulf %306, %307 : vector<24x64xf32>
    %c1_132 = arith.constant 1 : index
    %c0_133 = arith.constant 0 : index
    %c0_134 = arith.constant 0 : index
    %309 = vector.load %arg11[%c1_132, %c0_133, %c0_134] : memref<3x8x24xbf16, #tpu.memory_space<vmem>>, vector<1x8x24xbf16>
    %310 = vector.shape_cast %309 : vector<1x8x24xbf16> to vector<8x24xbf16>
    %311 = arith.truncf %302 : vector<24x64xf32> to vector<24x64xbf16>
    %cst_135 = arith.constant dense<0.000000e+00> : vector<8x64xf32>
    %312 = tpu.matmul %310, %311, %cst_135 {dimension_numbers = #tpu.dot_dimension_numbers<[1], [0], [0], [1], [0, 0, 1, 1], [], []>} : vector<8x24xbf16>, vector<24x64xbf16>, vector<8x64xf32> -> vector<8x64xf32>
    %c0_136 = arith.constant 0 : index
    %c0_137 = arith.constant 0 : index
    %c0_138 = arith.constant 0 : index
    %313 = vector.load %arg11[%c0_136, %c0_137, %c0_138] : memref<3x8x24xbf16, #tpu.memory_space<vmem>>, vector<1x8x24xbf16>
    %314 = vector.shape_cast %313 : vector<1x8x24xbf16> to vector<8x24xbf16>
    %315 = arith.truncf %305 : vector<24x64xf32> to vector<24x64xbf16>
    %cst_139 = arith.constant dense<0.000000e+00> : vector<8x64xf32>
    %316 = tpu.matmul %314, %315, %cst_139 {dimension_numbers = #tpu.dot_dimension_numbers<[1], [0], [0], [1], [0, 0, 1, 1], [], []>} : vector<8x24xbf16>, vector<24x64xbf16>, vector<8x64xf32> -> vector<8x64xf32>
    %317 = arith.addf %312, %316 : vector<8x64xf32>
    %c2_140 = arith.constant 2 : index
    %c0_141 = arith.constant 0 : index
    %c0_142 = arith.constant 0 : index
    %318 = vector.load %arg11[%c2_140, %c0_141, %c0_142] : memref<3x8x24xbf16, #tpu.memory_space<vmem>>, vector<1x8x24xbf16>
    %319 = vector.shape_cast %318 : vector<1x8x24xbf16> to vector<8x24xbf16>
    %320 = arith.truncf %308 : vector<24x64xf32> to vector<24x64xbf16>
    %cst_143 = arith.constant dense<0.000000e+00> : vector<8x64xf32>
    %321 = tpu.matmul %319, %320, %cst_143 {dimension_numbers = #tpu.dot_dimension_numbers<[1], [0], [0], [1], [0, 0, 1, 1], [], []>} : vector<8x24xbf16>, vector<24x64xbf16>, vector<8x64xf32> -> vector<8x64xf32>
    %322 = arith.addf %317, %321 : vector<8x64xf32>
    %323 = vector.shape_cast %322 : vector<8x64xf32> to vector<1x8x64xf32>
    %cst_144 = arith.constant dense<0.000000e+00> : vector<1xf32>
    %324 = vector.multi_reduction <add>, %323, %cst_144 [1, 2] : vector<1x8x64xf32> to vector<1xf32>
    %325 = vector.shape_cast %324 : vector<1xf32> to vector<1x1x1xf32>
    %326 = vector.extract %325[0, 0, 0] : f32 from vector<1x1x1xf32>
    %327 = arith.mulf %322, %322 : vector<8x64xf32>
    %328 = vector.shape_cast %327 : vector<8x64xf32> to vector<1x8x64xf32>
    %cst_145 = arith.constant dense<0.000000e+00> : vector<1xf32>
    %329 = vector.multi_reduction <add>, %328, %cst_145 [1, 2] : vector<1x8x64xf32> to vector<1xf32>
    %330 = vector.shape_cast %329 : vector<1xf32> to vector<1x1x1xf32>
    %331 = vector.extract %330[0, 0, 0] : f32 from vector<1x1x1xf32>
    %cst_146 = arith.constant 5.120000e+02 : f32
    %332 = arith.divf %326, %cst_146 : f32
    %cst_147 = arith.constant 5.120000e+02 : f32
    %333 = arith.divf %331, %cst_147 : f32
    %334 = arith.mulf %332, %332 : f32
    %335 = arith.subf %333, %334 : f32
    %336 = vector.broadcast %332 : f32 to vector<8x64xf32>
    %337 = arith.subf %322, %336 : vector<8x64xf32>
    %cst_148 = arith.constant 9.99999974E-6 : f32
    %338 = arith.addf %335, %cst_148 : f32
    %339 = math.rsqrt %338 : f32
    %340 = vector.broadcast %339 : f32 to vector<8x64xf32>
    %341 = arith.mulf %337, %340 : vector<8x64xf32>
    %c0_149 = arith.constant 0 : index
    %c0_150 = arith.constant 0 : index
    %342 = vector.load %arg12[%c0_149, %c0_150] : memref<8x1xf32, #tpu.memory_space<vmem>>, vector<8x1xf32>
    %343 = vector.broadcast %342 : vector<8x1xf32> to vector<8x64xf32>
    %344 = arith.mulf %341, %343 : vector<8x64xf32>
    %c0_151 = arith.constant 0 : index
    %c0_152 = arith.constant 0 : index
    %345 = vector.load %arg13[%c0_151, %c0_152] : memref<8x1xf32, #tpu.memory_space<vmem>>, vector<8x1xf32>
    %346 = vector.broadcast %345 : vector<8x1xf32> to vector<8x64xf32>
    %347 = arith.addf %344, %346 : vector<8x64xf32>
    %c0_153 = arith.constant 0 : index
    %c0_154 = arith.constant 0 : index
    %c0_155 = arith.constant 0 : index
    %348 = vector.load %arg15[%c0_153, %c0_154, %c0_155] : memref<1x8x1xf32, #tpu.memory_space<vmem>>, vector<1x8x1xf32>
    %349 = vector.shape_cast %348 : vector<1x8x1xf32> to vector<8x1xf32>
    %350 = vector.broadcast %349 : vector<8x1xf32> to vector<8x64xf32>
    %351 = arith.addf %347, %350 : vector<8x64xf32>
    %c0_156 = arith.constant 0 : index
    %c0_157 = arith.constant 0 : index
    %c0_158 = arith.constant 0 : index
    %352 = vector.load %arg16[%c0_156, %c0_157, %c0_158] : memref<1x8x64xf32, #tpu.memory_space<vmem>>, vector<1x8x64xf32>
    %353 = vector.shape_cast %352 : vector<1x8x64xf32> to vector<8x64xf32>
    %354 = vector.shape_cast %351 : vector<8x64xf32> to vector<1x8x64xf32>
    tpu.vector_store %arg16[%c0_156, %c0_157, %c0_158], %354 {strides = array<i32>} : memref<1x8x64xf32, #tpu.memory_space<vmem>>, vector<1x8x64xf32>,
    return
  }
  func.func @transform_0(%arg0: i32) -> (i32, i32, i32) {
    %c0_i32 = arith.constant 0 : i32
    %c0_i32_0 = arith.constant 0 : i32
    %c0_i32_1 = arith.constant 0 : i32
    return %arg0, %c0_i32, %c0_i32_0 : i32, i32, i32
  }
  func.func @transform_1(%arg0: i32) -> (i32, i32, i32) {
    %c0_i32 = arith.constant 0 : i32
    %c0_i32_0 = arith.constant 0 : i32
    %c0_i32_1 = arith.constant 0 : i32
    %c0_i32_2 = arith.constant 0 : i32
    return %c0_i32, %c0_i32_0, %c0_i32_1 : i32, i32, i32
  }
  func.func @transform_2(%arg0: i32) -> (i32, i32) {
    %c0_i32 = arith.constant 0 : i32
    %c0_i32_0 = arith.constant 0 : i32
    %c0_i32_1 = arith.constant 0 : i32
    return %c0_i32, %c0_i32_0 : i32, i32
  }
  func.func @transform_3(%arg0: i32) -> (i32, i32) {
    %c0_i32 = arith.constant 0 : i32
    %c0_i32_0 = arith.constant 0 : i32
    %c0_i32_1 = arith.constant 0 : i32
    return %c0_i32, %c0_i32_0 : i32, i32
  }
  func.func @transform_4(%arg0: i32) -> (i32, i32, i32) {
    %c0_i32 = arith.constant 0 : i32
    %c0_i32_0 = arith.constant 0 : i32
    %c0_i32_1 = arith.constant 0 : i32
    %c0_i32_2 = arith.constant 0 : i32
    return %c0_i32, %c0_i32_0, %c0_i32_1 : i32, i32, i32
  }
  func.func @transform_5(%arg0: i32) -> (i32, i32) {
    %c0_i32 = arith.constant 0 : i32
    %c0_i32_0 = arith.constant 0 : i32
    %c0_i32_1 = arith.constant 0 : i32
    return %c0_i32, %c0_i32_0 : i32, i32
  }
  func.func @transform_6(%arg0: i32) -> (i32, i32) {
    %c0_i32 = arith.constant 0 : i32
    %c0_i32_0 = arith.constant 0 : i32
    %c0_i32_1 = arith.constant 0 : i32
    return %c0_i32, %c0_i32_0 : i32, i32
  }
  func.func @transform_7(%arg0: i32) -> (i32, i32, i32) {
    %c0_i32 = arith.constant 0 : i32
    %c0_i32_0 = arith.constant 0 : i32
    %c0_i32_1 = arith.constant 0 : i32
    %c0_i32_2 = arith.constant 0 : i32
    return %c0_i32, %c0_i32_0, %c0_i32_1 : i32, i32, i32
  }
  func.func @transform_8(%arg0: i32) -> (i32, i32) {
    %c0_i32 = arith.constant 0 : i32
    %c0_i32_0 = arith.constant 0 : i32
    %c0_i32_1 = arith.constant 0 : i32
    return %c0_i32, %c0_i32_0 : i32, i32
  }
  func.func @transform_9(%arg0: i32) -> (i32, i32) {
    %c0_i32 = arith.constant 0 : i32
    %c0_i32_0 = arith.constant 0 : i32
    %c0_i32_1 = arith.constant 0 : i32
    return %c0_i32, %c0_i32_0 : i32, i32
  }
  func.func @transform_10(%arg0: i32) -> (i32, i32, i32) {
    %c0_i32 = arith.constant 0 : i32
    %c0_i32_0 = arith.constant 0 : i32
    %c0_i32_1 = arith.constant 0 : i32
    %c0_i32_2 = arith.constant 0 : i32
    return %c0_i32, %c0_i32_0, %c0_i32_1 : i32, i32, i32
  }
  func.func @transform_11(%arg0: i32) -> (i32, i32) {
    %c0_i32 = arith.constant 0 : i32
    %c0_i32_0 = arith.constant 0 : i32
    %c0_i32_1 = arith.constant 0 : i32
    return %c0_i32, %c0_i32_0 : i32, i32
  }
  func.func @transform_12(%arg0: i32) -> (i32, i32) {
    %c0_i32 = arith.constant 0 : i32
    %c0_i32_0 = arith.constant 0 : i32
    %c0_i32_1 = arith.constant 0 : i32
    return %c0_i32, %c0_i32_0 : i32, i32
  }
  func.func @transform_13(%arg0: i32) -> (i32, i32) {
    %c0_i32 = arith.constant 0 : i32
    %c0_i32_0 = arith.constant 0 : i32
    %c0_i32_1 = arith.constant 0 : i32
    return %c0_i32, %c0_i32_0 : i32, i32
  }
  func.func @transform_14(%arg0: i32) -> (i32, i32, i32) {
    %c0_i32 = arith.constant 0 : i32
    %c0_i32_0 = arith.constant 0 : i32
    %c0_i32_1 = arith.constant 0 : i32
    return %arg0, %c0_i32, %c0_i32_0 : i32, i32, i32
  }
  func.func @transform_15(%arg0: i32) -> (i32, i32, i32) {
    %c0_i32 = arith.constant 0 : i32
    %c0_i32_0 = arith.constant 0 : i32
    %c0_i32_1 = arith.constant 0 : i32
    return %arg0, %c0_i32, %c0_i32_0 : i32, i32, i32
  }
}

</mosaic_0001>

<llo_original>
// kernel: down_forward.1
$region0: #{down_forward.1}
  #allocation0 [shape = 'u32[]', space=smem, size = 0x4, offset = 0x4, fixed_abs, tag = 'smem constant byte address 0x4 - core index']
  #allocation1 [shape = 'u32[144,128]{1,0:T(1,128)}', space=vmem, size = 0x12000, scoped, tag = 'internal scratch']
  #allocation2 [shape = 'f32[128,4]{1,0:T(8,128)}', space=vmem, size = 0x10000, scoped, tag = 'scratch operand']
  %s0 = inlined_call_operand.vmem [shape: f32[2,4,256], index: 0, kind: input, shape index: {}]
  %s1 = inlined_call_operand.vmem [shape: bf16[3,4,12], index: 1, kind: input, shape index: {}]
  %s2 = inlined_call_operand.vmem [shape: f32[4,1], index: 2, kind: input, shape index: {}]
  %s3 = inlined_call_operand.vmem [shape: f32[4,1], index: 3, kind: input, shape index: {}]
  %s4 = inlined_call_operand.vmem [shape: bf16[3,4,12], index: 4, kind: input, shape index: {}]
  %s5 = inlined_call_operand.vmem [shape: f32[4,1], index: 5, kind: input, shape index: {}]
  %s6 = inlined_call_operand.vmem [shape: f32[4,1], index: 6, kind: input, shape index: {}]
  %s7 = inlined_call_operand.vmem [shape: bf16[3,8,12], index: 7, kind: input, shape index: {}]
  %s8 = inlined_call_operand.vmem [shape: f32[8,1], index: 8, kind: input, shape index: {}]
  %s9 = inlined_call_operand.vmem [shape: f32[8,1], index: 9, kind: input, shape index: {}]
  %s10 = inlined_call_operand.vmem [shape: bf16[3,8,24], index: 10, kind: input, shape index: {}]
  %s11 = inlined_call_operand.vmem [shape: f32[8,1], index: 11, kind: input, shape index: {}]
  %s12 = inlined_call_operand.vmem [shape: f32[8,1], index: 12, kind: input, shape index: {}]
  %s13 = inlined_call_operand.vmem [shape: f32[4,64], index: 13, kind: input, shape index: {}]
  %s14 = inlined_call_operand.vmem [shape: f32[2,8,1], index: 14, kind: input, shape index: {}]
  %s15 = inlined_call_operand.vmem [shape: f32[2,8,64], index: 15, kind: output, shape index: {}]
  %s16 = sld [smem:[#allocation0]]
  $region93: #{down_forward.1} parent=0
    _
  %s18 = ssub.s32 1, %s16
  %s19 = scalar_select 0, %s18, %s16
  loop: start=0, step=1, limit=4
  $region2: #{down_forward.1} parent=0 // loop_pre_header
    _
  $region3: #{down_forward.1} parent=0 // loop_header
    %s21 = sphi 0, %s25
    %p22 = scmp.ge.s32.totalorder %s21, 4
    %s31 = sphi 0, %s33
    %s34 = sphi 0, %s31
    %s35 = sphi 0, %s34
    %s51 = sphi 0, %s35
    %s55 = sphi 0, %s55
    %s57 = sphi 0, %s55
    %s58 = sphi 0, %s57
    %s72 = sphi 0, %s58
    %s76 = sphi 0, %s76
    %s78 = sphi 0, %s76
    %s79 = sphi 0, %s78
    %s93 = sphi 0, %s79
    %s97 = sphi 0, %s97
    %s99 = sphi 0, %s97
    %s100 = sphi 0, %s99
    %s114 = sphi 0, %s100
    %s118 = sphi 0, %s118
    %s120 = sphi 0, %s118
    %s121 = sphi 0, %s120
    %s135 = sphi 0, %s121
    %s139 = sphi 0, %s139
    %s141 = sphi 0, %s139
    %s142 = sphi 0, %s141
    %s156 = sphi 0, %s142
    %s160 = sphi 0, %s160
    %s162 = sphi 0, %s160
    %s163 = sphi 0, %s162
    %s177 = sphi 0, %s163
    %s181 = sphi 0, %s181
    %s183 = sphi 0, %s181
    %s184 = sphi 0, %s183
    %s198 = sphi 0, %s184
    %s202 = sphi 0, %s202
    %s204 = sphi 0, %s202
    %s205 = sphi 0, %s204
    %s219 = sphi 0, %s205
    %s223 = sphi 0, %s223
    %s225 = sphi 0, %s223
    %s226 = sphi 0, %s225
    %s240 = sphi 0, %s226
    %s244 = sphi 0, %s244
    %s246 = sphi 0, %s244
    %s247 = sphi 0, %s246
    %s261 = sphi 0, %s247
    %s265 = sphi 0, %s265
    %s267 = sphi 0, %s265
    %s268 = sphi 0, %s267
    %s282 = sphi 0, %s268
    %s286 = sphi 0, %s286
    %s288 = sphi 0, %s286
    %s289 = sphi 0, %s288
    %s303 = sphi 0, %s289
    %s307 = sphi 0, %s307
    %s309 = sphi 0, %s307
    %s310 = sphi 0, %s309
    %s324 = sphi 0, %s310
    %s330 = sphi 0, %s332
    %s333 = sphi 0, %s330
    %s334 = sphi 0, %s333
    %s350 = sphi 0, %s334
    %s356 = sphi 0, %s358
    %s359 = sphi 0, %s356
    %s360 = sphi 0, %s359
    %s376 = sphi 0, %s360
  $region4: #{down_forward.1} parent=0 // loop_header_branch
    %24 = sbr.rel (%p22) target = $region8
  $region5: #{down_forward.1} parent=0 // loop_body
    %s26 = ssub.s32 %s21, 1
    %s27 = ssub.s32 %s21, 2
    %s28 = sadd.s32 %s21, 1
    %s29 = ssub.s32 %s21, %s28
    %p30 = scmp.eq.s32.totalorder %s29, 0
    %s32 = sadd.s32 %s31, 1
    %s33 = scalar_select %p30, %s31, %s32
    %p36 = pneg %p30
    %p37 = scmp.eq.s32.totalorder %s21, 1
    %p38 = por %p36, %p37
    %p39 = scmp.ne.s32.totalorder %s31, %s34
    %p40 = scmp.eq.s32.totalorder %s21, 0
    %p41 = por %p39, %p40
    %p42 = scmp.ne.s32.totalorder %s31, %s34
    %p43 = scmp.eq.s32.totalorder %s26, 1
    %p44 = por %p42, %p43
    %p45 = scmp.ne.s32.totalorder %s34, %s35
    %p46 = scmp.eq.s32.totalorder %s26, 0
    %p47 = por %p45, %p46
    %p48 = scmp.ne.s32.totalorder %s34, %s35
    %p49 = scmp.eq.s32.totalorder %s27, 1
    %p50 = por %p48, %p49
    %p52 = scmp.ne.s32.totalorder %s35, %s51
    %p53 = scmp.eq.s32.totalorder %s27, 0
    %p54 = por %p52, %p53
    %s56 = sadd.s32 %s55, 1
    %p59 = scmp.eq.s32.totalorder %s21, 1
    %p60 = scmp.ne.s32.totalorder %s55, %s57
    %p61 = scmp.eq.s32.totalorder %s21, 0
    %p62 = por %p60, %p61
    %p63 = scmp.ne.s32.totalorder %s55, %s57
    %p64 = scmp.eq.s32.totalorder %s26, 1
    %p65 = por %p63, %p64
    %p66 = scmp.ne.s32.totalorder %s57, %s58
    %p67 = scmp.eq.s32.totalorder %s26, 0
    %p68 = por %p66, %p67
    %p69 = scmp.ne.s32.totalorder %s57, %s58
    %p70 = scmp.eq.s32.totalorder %s27, 1
    %p71 = por %p69, %p70
    %p73 = scmp.ne.s32.totalorder %s58, %s72
    %p74 = scmp.eq.s32.totalorder %s27, 0
    %p75 = por %p73, %p74
    %s77 = sadd.s32 %s76, 1
    %p80 = scmp.eq.s32.totalorder %s21, 1
    %p81 = scmp.ne.s32.totalorder %s76, %s78
    %p82 = scmp.eq.s32.totalorder %s21, 0
    %p83 = por %p81, %p82
    %p84 = scmp.ne.s32.totalorder %s76, %s78
    %p85 = scmp.eq.s32.totalorder %s26, 1
    %p86 = por %p84, %p85
    %p87 = scmp.ne.s32.totalorder %s78, %s79
    %p88 = scmp.eq.s32.totalorder %s26, 0
    %p89 = por %p87, %p88
    %p90 = scmp.ne.s32.totalorder %s78, %s79
    %p91 = scmp.eq.s32.totalorder %s27, 1
    %p92 = por %p90, %p91
    %p94 = scmp.ne.s32.totalorder %s79, %s93
    %p95 = scmp.eq.s32.totalorder %s27, 0
    %p96 = por %p94, %p95
    %s98 = sadd.s32 %s97, 1
    %p101 = scmp.eq.s32.totalorder %s21, 1
    %p102 = scmp.ne.s32.totalorder %s97, %s99
    %p103 = scmp.eq.s32.totalorder %s21, 0
    %p104 = por %p102, %p103
    %p105 = scmp.ne.s32.totalorder %s97, %s99
    %p106 = scmp.eq.s32.totalorder %s26, 1
    %p107 = por %p105, %p106
    %p108 = scmp.ne.s32.totalorder %s99, %s100
    %p109 = scmp.eq.s32.totalorder %s26, 0
    %p110 = por %p108, %p109
    %p111 = scmp.ne.s32.totalorder %s99, %s100
    %p112 = scmp.eq.s32.totalorder %s27, 1
    %p113 = por %p111, %p112
    %p115 = scmp.ne.s32.totalorder %s100, %s114
    %p116 = scmp.eq.s32.totalorder %s27, 0
    %p117 = por %p115, %p116
    %s119 = sadd.s32 %s118, 1
    %p122 = scmp.eq.s32.totalorder %s21, 1
    %p123 = scmp.ne.s32.totalorder %s118, %s120
    %p124 = scmp.eq.s32.totalorder %s21, 0
    %p125 = por %p123, %p124
    %p126 = scmp.ne.s32.totalorder %s118, %s120
    %p127 = scmp.eq.s32.totalorder %s26, 1
    %p128 = por %p126, %p127
    %p129 = scmp.ne.s32.totalorder %s120, %s121
    %p130 = scmp.eq.s32.totalorder %s26, 0
    %p131 = por %p129, %p130
    %p132 = scmp.ne.s32.totalorder %s120, %s121
    %p133 = scmp.eq.s32.totalorder %s27, 1
    %p134 = por %p132, %p133
    %p136 = scmp.ne.s32.totalorder %s121, %s135
    %p137 = scmp.eq.s32.totalorder %s27, 0
    %p138 = por %p136, %p137
    %s140 = sadd.s32 %s139, 1
    %p143 = scmp.eq.s32.totalorder %s21, 1
    %p144 = scmp.ne.s32.totalorder %s139, %s141
    %p145 = scmp.eq.s32.totalorder %s21, 0
    %p146 = por %p144, %p145
    %p147 = scmp.ne.s32.totalorder %s139, %s141
    %p148 = scmp.eq.s32.totalorder %s26, 1
    %p149 = por %p147, %p148
    %p150 = scmp.ne.s32.totalorder %s141, %s142
    %p151 = scmp.eq.s32.totalorder %s26, 0
    %p152 = por %p150, %p151
    %p153 = scmp.ne.s32.totalorder %s141, %s142
    %p154 = scmp.eq.s32.totalorder %s27, 1
    %p155 = por %p153, %p154
    %p157 = scmp.ne.s32.totalorder %s142, %s156
    %p158 = scmp.eq.s32.totalorder %s27, 0
    %p159 = por %p157, %p158
    %s161 = sadd.s32 %s160, 1
    %p164 = scmp.eq.s32.totalorder %s21, 1
    %p165 = scmp.ne.s32.totalorder %s160, %s162
    %p166 = scmp.eq.s32.totalorder %s21, 0
    %p167 = por %p165, %p166
    %p168 = scmp.ne.s32.totalorder %s160, %s162
    %p169 = scmp.eq.s32.totalorder %s26, 1
    %p170 = por %p168, %p169
    %p171 = scmp.ne.s32.totalorder %s162, %s163
    %p172 = scmp.eq.s32.totalorder %s26, 0
    %p173 = por %p171, %p172
    %p174 = scmp.ne.s32.totalorder %s162, %s163
    %p175 = scmp.eq.s32.totalorder %s27, 1
    %p176 = por %p174, %p175
    %p178 = scmp.ne.s32.totalorder %s163, %s177
    %p179 = scmp.eq.s32.totalorder %s27, 0
    %p180 = por %p178, %p179
    %s182 = sadd.s32 %s181, 1
    %p185 = scmp.eq.s32.totalorder %s21, 1
    %p186 = scmp.ne.s32.totalorder %s181, %s183
    %p187 = scmp.eq.s32.totalorder %s21, 0
    %p188 = por %p186, %p187
    %p189 = scmp.ne.s32.totalorder %s181, %s183
    %p190 = scmp.eq.s32.totalorder %s26, 1
    %p191 = por %p189, %p190
    %p192 = scmp.ne.s32.totalorder %s183, %s184
    %p193 = scmp.eq.s32.totalorder %s26, 0
    %p194 = por %p192, %p193
    %p195 = scmp.ne.s32.totalorder %s183, %s184
    %p196 = scmp.eq.s32.totalorder %s27, 1
    %p197 = por %p195, %p196
    %p199 = scmp.ne.s32.totalorder %s184, %s198
    %p200 = scmp.eq.s32.totalorder %s27, 0
    %p201 = por %p199, %p200
    %s203 = sadd.s32 %s202, 1
    %p206 = scmp.eq.s32.totalorder %s21, 1
    %p207 = scmp.ne.s32.totalorder %s202, %s204
    %p208 = scmp.eq.s32.totalorder %s21, 0
    %p209 = por %p207, %p208
    %p210 = scmp.ne.s32.totalorder %s202, %s204
    %p211 = scmp.eq.s32.totalorder %s26, 1
    %p212 = por %p210, %p211
    %p213 = scmp.ne.s32.totalorder %s204, %s205
    %p214 = scmp.eq.s32.totalorder %s26, 0
    %p215 = por %p213, %p214
    %p216 = scmp.ne.s32.totalorder %s204, %s205
    %p217 = scmp.eq.s32.totalorder %s27, 1
    %p218 = por %p216, %p217
    %p220 = scmp.ne.s32.totalorder %s205, %s219
    %p221 = scmp.eq.s32.totalorder %s27, 0
    %p222 = por %p220, %p221
    %s224 = sadd.s32 %s223, 1
    %p227 = scmp.eq.s32.totalorder %s21, 1
    %p228 = scmp.ne.s32.totalorder %s223, %s225
    %p229 = scmp.eq.s32.totalorder %s21, 0
    %p230 = por %p228, %p229
    %p231 = scmp.ne.s32.totalorder %s223, %s225
    %p232 = scmp.eq.s32.totalorder %s26, 1
    %p233 = por %p231, %p232
    %p234 = scmp.ne.s32.totalorder %s225, %s226
    %p235 = scmp.eq.s32.totalorder %s26, 0
    %p236 = por %p234, %p235
    %p237 = scmp.ne.s32.totalorder %s225, %s226
    %p238 = scmp.eq.s32.totalorder %s27, 1
    %p239 = por %p237, %p238
    %p241 = scmp.ne.s32.totalorder %s226, %s240
    %p242 = scmp.eq.s32.totalorder %s27, 0
    %p243 = por %p241, %p242
    %s245 = sadd.s32 %s244, 1
    %p248 = scmp.eq.s32.totalorder %s21, 1
    %p249 = scmp.ne.s32.totalorder %s244, %s246
    %p250 = scmp.eq.s32.totalorder %s21, 0
    %p251 = por %p249, %p250
    %p252 = scmp.ne.s32.totalorder %s244, %s246
    %p253 = scmp.eq.s32.totalorder %s26, 1
    %p254 = por %p252, %p253
    %p255 = scmp.ne.s32.totalorder %s246, %s247
    %p256 = scmp.eq.s32.totalorder %s26, 0
    %p257 = por %p255, %p256
    %p258 = scmp.ne.s32.totalorder %s246, %s247
    %p259 = scmp.eq.s32.totalorder %s27, 1
    %p260 = por %p258, %p259
    %p262 = scmp.ne.s32.totalorder %s247, %s261
    %p263 = scmp.eq.s32.totalorder %s27, 0
    %p264 = por %p262, %p263
    %s266 = sadd.s32 %s265, 1
    %p269 = scmp.eq.s32.totalorder %s21, 1
    %p270 = scmp.ne.s32.totalorder %s265, %s267
    %p271 = scmp.eq.s32.totalorder %s21, 0
    %p272 = por %p270, %p271
    %p273 = scmp.ne.s32.totalorder %s265, %s267
    %p274 = scmp.eq.s32.totalorder %s26, 1
    %p275 = por %p273, %p274
    %p276 = scmp.ne.s32.totalorder %s267, %s268
    %p277 = scmp.eq.s32.totalorder %s26, 0
    %p278 = por %p276, %p277
    %p279 = scmp.ne.s32.totalorder %s267, %s268
    %p280 = scmp.eq.s32.totalorder %s27, 1
    %p281 = por %p279, %p280
    %p283 = scmp.ne.s32.totalorder %s268, %s282
    %p284 = scmp.eq.s32.totalorder %s27, 0
    %p285 = por %p283, %p284
    %s287 = sadd.s32 %s286, 1
    %p290 = scmp.eq.s32.totalorder %s21, 1
    %p291 = scmp.ne.s32.totalorder %s286, %s288
    %p292 = scmp.eq.s32.totalorder %s21, 0
    %p293 = por %p291, %p292
    %p294 = scmp.ne.s32.totalorder %s286, %s288
    %p295 = scmp.eq.s32.totalorder %s26, 1
    %p296 = por %p294, %p295
    %p297 = scmp.ne.s32.totalorder %s288, %s289
    %p298 = scmp.eq.s32.totalorder %s26, 0
    %p299 = por %p297, %p298
    %p300 = scmp.ne.s32.totalorder %s288, %s289
    %p301 = scmp.eq.s32.totalorder %s27, 1
    %p302 = por %p300, %p301
    %p304 = scmp.ne.s32.totalorder %s289, %s303
    %p305 = scmp.eq.s32.totalorder %s27, 0
    %p306 = por %p304, %p305
    %s308 = sadd.s32 %s307, 1
    %p311 = scmp.eq.s32.totalorder %s21, 1
    %p312 = scmp.ne.s32.totalorder %s307, %s309
    %p313 = scmp.eq.s32.totalorder %s21, 0
    %p314 = por %p312, %p313
    %p315 = scmp.ne.s32.totalorder %s307, %s309
    %p316 = scmp.eq.s32.totalorder %s26, 1
    %p317 = por %p315, %p316
    %p318 = scmp.ne.s32.totalorder %s309, %s310
    %p319 = scmp.eq.s32.totalorder %s26, 0
    %p320 = por %p318, %p319
    %p321 = scmp.ne.s32.totalorder %s309, %s310
    %p322 = scmp.eq.s32.totalorder %s27, 1
    %p323 = por %p321, %p322
    %p325 = scmp.ne.s32.totalorder %s310, %s324
    %p326 = scmp.eq.s32.totalorder %s27, 0
    %p327 = por %p325, %p326
    %s328 = ssub.s32 %s21, %s28
    %p329 = scmp.eq.s32.totalorder %s328, 0
    %s331 = sadd.s32 %s330, 1
    %s332 = scalar_select %p329, %s330, %s331
    %p335 = pneg %p329
    %p336 = scmp.eq.s32.totalorder %s21, 1
    %p337 = por %p335, %p336
    %p338 = scmp.ne.s32.totalorder %s330, %s333
    %p339 = scmp.eq.s32.totalorder %s21, 0
    %p340 = por %p338, %p339
    %p341 = scmp.ne.s32.totalorder %s330, %s333
    %p342 = scmp.eq.s32.totalorder %s26, 1
    %p343 = por %p341, %p342
    %p344 = scmp.ne.s32.totalorder %s333, %s334
    %p345 = scmp.eq.s32.totalorder %s26, 0
    %p346 = por %p344, %p345
    %p347 = scmp.ne.s32.totalorder %s333, %s334
    %p348 = scmp.eq.s32.totalorder %s27, 1
    %p349 = por %p347, %p348
    %p351 = scmp.ne.s32.totalorder %s334, %s350
    %p352 = scmp.eq.s32.totalorder %s27, 0
    %p353 = por %p351, %p352
    %s354 = ssub.s32 %s21, %s28
    %p355 = scmp.eq.s32.totalorder %s354, 0
    %s357 = sadd.s32 %s356, 1
    %s358 = scalar_select %p355, %s356, %s357
    %p361 = pneg %p355
    %p362 = scmp.eq.s32.totalorder %s21, 1
    %p363 = por %p361, %p362
    %p364 = scmp.ne.s32.totalorder %s356, %s359
    %p365 = scmp.eq.s32.totalorder %s21, 0
    %p366 = por %p364, %p365
    %p367 = scmp.ne.s32.totalorder %s356, %s359
    %p368 = scmp.eq.s32.totalorder %s26, 1
    %p369 = por %p367, %p368
    %p370 = scmp.ne.s32.totalorder %s359, %s360
    %p371 = scmp.eq.s32.totalorder %s26, 0
    %p372 = por %p370, %p371
    %p373 = scmp.ne.s32.totalorder %s359, %s360
    %p374 = scmp.eq.s32.totalorder %s27, 1
    %p375 = por %p373, %p374
    %p377 = scmp.ne.s32.totalorder %s360, %s376
    %p378 = scmp.eq.s32.totalorder %s27, 0
    %p379 = por %p377, %p378
    %p380 = scmp.le.s32.totalorder 1, %s21
    %p381 = scmp.lt.s32.totalorder %s21, 3
    %p382 = pnand %p380, %p381
    %p383 = pneg %p382
    // Predicated region
    $region9: #{down_forward.1} parent=5 // pred_check
      _
    $region10: #{down_forward.1} parent=5 // pred_check_branch
      %385 = sbr.rel (%p382) target = $region12
    $region11: #{down_forward.1} parent=5 // pred_region
      %s386 = ssub.s32 %s21, 1
      // Predicated region
      $region13: #{down_forward.1} parent=11 // pred_check
        %p387 = pneg %p68
      $region14: #{down_forward.1} parent=11 // pred_check_branch
        %389 = sbr.rel (%p387) target = $region16
      $region15: #{down_forward.1} parent=11 // pred_region
        _
      $region16: #{down_forward.1} parent=11 // pred_fallthru
        _
      // Predicated region
      $region17: #{down_forward.1} parent=11 // pred_check
        %p390 = pneg %p89
      $region18: #{down_forward.1} parent=11 // pred_check_branch
        %392 = sbr.rel (%p390) target = $region20
      $region19: #{down_forward.1} parent=11 // pred_region
        _
      $region20: #{down_forward.1} parent=11 // pred_fallthru
        _
      // Predicated region
      $region21: #{down_forward.1} parent=11 // pred_check
        %p393 = pneg %p110
      $region22: #{down_forward.1} parent=11 // pred_check_branch
        %395 = sbr.rel (%p393) target = $region24
      $region23: #{down_forward.1} parent=11 // pred_region
        _
      $region24: #{down_forward.1} parent=11 // pred_fallthru
        _
      // Predicated region
      $region25: #{down_forward.1} parent=11 // pred_check
        %p396 = pneg %p131
      $region26: #{down_forward.1} parent=11 // pred_check_branch
        %398 = sbr.rel (%p396) target = $region28
      $region27: #{down_forward.1} parent=11 // pred_region
        _
      $region28: #{down_forward.1} parent=11 // pred_fallthru
        _
      // Predicated region
      $region29: #{down_forward.1} parent=11 // pred_check
        %p399 = pneg %p152
      $region30: #{down_forward.1} parent=11 // pred_check_branch
        %401 = sbr.rel (%p399) target = $region32
      $region31: #{down_forward.1} parent=11 // pred_region
        _
      $region32: #{down_forward.1} parent=11 // pred_fallthru
        _
      // Predicated region
      $region33: #{down_forward.1} parent=11 // pred_check
        %p402 = pneg %p173
      $region34: #{down_forward.1} parent=11 // pred_check_branch
        %404 = sbr.rel (%p402) target = $region36
      $region35: #{down_forward.1} parent=11 // pred_region
        _
      $region36: #{down_forward.1} parent=11 // pred_fallthru
        _
      // Predicated region
      $region37: #{down_forward.1} parent=11 // pred_check
        %p405 = pneg %p194
      $region38: #{down_forward.1} parent=11 // pred_check_branch
        %407 = sbr.rel (%p405) target = $region40
      $region39: #{down_forward.1} parent=11 // pred_region
        _
      $region40: #{down_forward.1} parent=11 // pred_fallthru
        _
      // Predicated region
      $region41: #{down_forward.1} parent=11 // pred_check
        %p408 = pneg %p215
      $region42: #{down_forward.1} parent=11 // pred_check_branch
        %410 = sbr.rel (%p408) target = $region44
      $region43: #{down_forward.1} parent=11 // pred_region
        _
      $region44: #{down_forward.1} parent=11 // pred_fallthru
        _
      // Predicated region
      $region45: #{down_forward.1} parent=11 // pred_check
        %p411 = pneg %p236
      $region46: #{down_forward.1} parent=11 // pred_check_branch
        %413 = sbr.rel (%p411) target = $region48
      $region47: #{down_forward.1} parent=11 // pred_region
        _
      $region48: #{down_forward.1} parent=11 // pred_fallthru
        _
      // Predicated region
      $region49: #{down_forward.1} parent=11 // pred_check
        %p414 = pneg %p257
      $region50: #{down_forward.1} parent=11 // pred_check_branch
        %416 = sbr.rel (%p414) target = $region52
      $region51: #{down_forward.1} parent=11 // pred_region
        _
      $region52: #{down_forward.1} parent=11 // pred_fallthru
        _
      // Predicated region
      $region53: #{down_forward.1} parent=11 // pred_check
        %p417 = pneg %p278
      $region54: #{down_forward.1} parent=11 // pred_check_branch
        %419 = sbr.rel (%p417) target = $region56
      $region55: #{down_forward.1} parent=11 // pred_region
        _
      $region56: #{down_forward.1} parent=11 // pred_fallthru
        _
      // Predicated region
      $region57: #{down_forward.1} parent=11 // pred_check
        %p420 = pneg %p299
      $region58: #{down_forward.1} parent=11 // pred_check_branch
        %422 = sbr.rel (%p420) target = $region60
      $region59: #{down_forward.1} parent=11 // pred_region
        _
      $region60: #{down_forward.1} parent=11 // pred_fallthru
        _
      // Predicated region
      $region61: #{down_forward.1} parent=11 // pred_check
        %p423 = pneg %p320
      $region62: #{down_forward.1} parent=11 // pred_check_branch
        %425 = sbr.rel (%p423) target = $region64
      $region63: #{down_forward.1} parent=11 // pred_region
        _
      $region64: #{down_forward.1} parent=11 // pred_fallthru
        _
    $region12: #{down_forward.1} parent=5 // pred_fallthru
      _
    %p426 = scmp.lt.s32.totalorder %s21, 2
    // Predicated region
    $region65: #{down_forward.1} parent=5 // pred_check
      %p427 = pneg %p426
    $region66: #{down_forward.1} parent=5 // pred_check_branch
      %429 = sbr.rel (%p427) target = $region68
    $region67: #{down_forward.1} parent=5 // pred_region
      // Predicated region
      $region69: #{down_forward.1} parent=67 // pred_check
        %p430 = pneg %p41
      $region70: #{down_forward.1} parent=67 // pred_check_branch
        %432 = sbr.rel (%p430) target = $region72
      $region71: #{down_forward.1} parent=67 // pred_region
        %p433 = scmp.lt.s32.totalorder %s21, 1
        %s434 = scalar_select %p433, %s21, 1
        %s435 = smul.addr %s434, 2
        %s436 = smul.addr %s435, 4
        %s437 = scalar_lea.vmem %s0, %s436
      $region72: #{down_forward.1} parent=67 // pred_fallthru
        _
      // Predicated region
      $region73: #{down_forward.1} parent=67 // pred_check
        %p438 = pneg %p340
      $region74: #{down_forward.1} parent=67 // pred_check_branch
        %440 = sbr.rel (%p438) target = $region76
      $region75: #{down_forward.1} parent=67 // pred_region
        %p441 = scmp.lt.s32.totalorder %s21, 1
        %s442 = scalar_select %p441, %s21, 1
        %s443 = smul.addr %s442, 8
        %s444 = scalar_lea.vmem %s14, %s443
      $region76: #{down_forward.1} parent=67 // pred_fallthru
        _
    $region68: #{down_forward.1} parent=5 // pred_fallthru
      _
    %p445 = scmp.le.s32.totalorder 1, %s21
    %p446 = scmp.lt.s32.totalorder %s21, 3
    %p447 = pnand %p445, %p446
    %p448 = pneg %p447
    // Predicated region
    $region77: #{down_forward.1} parent=5 // pred_check
      _
    $region78: #{down_forward.1} parent=5 // pred_check_branch
      %450 = sbr.rel (%p447) target = $region80
    $region79: #{down_forward.1} parent=5 // pred_region
      %s451 = ssub.s32 %s21, 1
      %p452 = scmp.lt.s32.totalorder %s26, 1
      %s453 = scalar_select %p452, %s26, 1
      %s454 = smul.addr %s453, 2
      %s455 = smul.addr %s454, 4
      %s456 = scalar_lea.vmem %s0, %s455
      %p457 = pneg %p47
      %p458 = pneg %p44
      %p459 = pneg %p68
      %p460 = pneg %p65
      %p461 = pneg %p89
      %p462 = pneg %p86
      %p463 = pneg %p110
      %p464 = pneg %p107
      %p465 = pneg %p131
      %p466 = pneg %p128
      %p467 = pneg %p152
      %p468 = pneg %p149
      %p469 = pneg %p173
      %p470 = pneg %p170
      %p471 = pneg %p194
      %p472 = pneg %p191
      %p473 = pneg %p215
      %p474 = pneg %p212
      %p475 = pneg %p236
      %p476 = pneg %p233
      %p477 = pneg %p257
      %p478 = pneg %p254
      %p479 = pneg %p278
      %p480 = pneg %p275
      %p481 = pneg %p299
      %p482 = pneg %p296
      %p483 = pneg %p320
      %p484 = pneg %p317
      %p485 = scmp.lt.s32.totalorder %s26, 1
      %s486 = scalar_select %p485, %s26, 1
      %s487 = smul.addr %s486, 8
      %s488 = scalar_lea.vmem %s14, %s487
      %p489 = pneg %p346
      %p490 = pneg %p343
      %p491 = pneg %p372
      %p492 = pneg %p369
      %p493 = scmp.lt.s32.totalorder %s26, 1
      %s494 = scalar_select %p493, %s26, 1
      %s495 = smul.addr %s494, 8
      %s496 = scalar_lea.vmem %s15, %s495
      %p497 = scmp.lt.s32.totalorder %s26, 1
      %s498 = scalar_select %p497, %s26, 1
      %s499 = smul.addr %s498, 2
      %s500 = smul.addr %s499, 4
      %s501 = scalar_lea.vmem %s0, %s500
      %p502 = scmp.lt.s32.totalorder %s26, 1
      %s503 = scalar_select %p502, %s26, 1
      %s504 = smul.addr %s503, 8
      %s505 = scalar_lea.vmem %s14, %s504
      %p506 = scmp.lt.s32.totalorder %s26, 1
      %s507 = scalar_select %p506, %s26, 1
      %s508 = smul.addr %s507, 8
      %s509 = scalar_lea.vmem %s15, %s508
      %v511 = vld [vmem:[%s501] sm:$0xff]
      %v513 = vcombine.high %v511, %v511
      %515 = vxpose.xlu0.b32.start [1/16] %v511, 128
      %516 = vxpose.xlu0.b32.cont [2/16] 0.0, 128
      %517 = vxpose.xlu0.b32.cont [3/16] 0.0, 128
      %518 = vxpose.xlu0.b32.cont [4/16] 0.0, 128
      %519 = vxpose.xlu0.b32.cont [5/16] 0.0, 128
      %520 = vxpose.xlu0.b32.cont [6/16] 0.0, 128
      %521 = vxpose.xlu0.b32.cont [7/16] 0.0, 128
      %522 = vxpose.xlu0.b32.cont [8/16] 0.0, 128
      %523 = vxpose.xlu0.b32.cont [9/16] 0.0, 128
      %524 = vxpose.xlu0.b32.cont [10/16] 0.0, 128
      %525 = vxpose.xlu0.b32.cont [11/16] 0.0, 128
      %526 = vxpose.xlu0.b32.cont [12/16] 0.0, 128
      %527 = vxpose.xlu0.b32.cont [13/16] 0.0, 128
      %528 = vxpose.xlu0.b32.cont [14/16] 0.0, 128
      %529 = vxpose.xlu0.b32.cont [15/16] 0.0, 128
      %530 = vxpose.xlu0.b32.end [16/16] 0.0, 128
      %v531 = vpop.trf.xlu0
      %v532 = vpop.trf.xlu0
      %v533 = vpop.trf.xlu0
      %v534 = vpop.trf.xlu0
      %v535 = vpop.trf.xlu0
      %v536 = vpop.trf.xlu0
      %v537 = vpop.trf.xlu0
      %v538 = vpop.trf.xlu0
      %v539 = vpop.trf.xlu0
      %v540 = vpop.trf.xlu0
      %v541 = vpop.trf.xlu0
      %v542 = vpop.trf.xlu0
      %v543 = vpop.trf.xlu0
      %v544 = vpop.trf.xlu0
      %v545 = vpop.trf.xlu0
      %v546 = vpop.trf.xlu0
      %547 = vxpose.xlu0.b32.start [1/16] %v513, 128
      %548 = vxpose.xlu0.b32.cont [2/16] 0.0, 128
      %549 = vxpose.xlu0.b32.cont [3/16] 0.0, 128
      %550 = vxpose.xlu0.b32.cont [4/16] 0.0, 128
      %551 = vxpose.xlu0.b32.cont [5/16] 0.0, 128
      %552 = vxpose.xlu0.b32.cont [6/16] 0.0, 128
      %553 = vxpose.xlu0.b32.cont [7/16] 0.0, 128
      %554 = vxpose.xlu0.b32.cont [8/16] 0.0, 128
      %555 = vxpose.xlu0.b32.cont [9/16] 0.0, 128
      %556 = vxpose.xlu0.b32.cont [10/16] 0.0, 128
      %557 = vxpose.xlu0.b32.cont [11/16] 0.0, 128
      %558 = vxpose.xlu0.b32.cont [12/16] 0.0, 128
      %559 = vxpose.xlu0.b32.cont [13/16] 0.0, 128
      %560 = vxpose.xlu0.b32.cont [14/16] 0.0, 128
      %561 = vxpose.xlu0.b32.cont [15/16] 0.0, 128
      %562 = vxpose.xlu0.b32.end [16/16] 0.0, 128
      %v563 = vpop.trf.xlu0
      %v564 = vpop.trf.xlu0
      %v565 = vpop.trf.xlu0
      %v566 = vpop.trf.xlu0
      %v567 = vpop.trf.xlu0
      %v568 = vpop.trf.xlu0
      %v569 = vpop.trf.xlu0
      %v570 = vpop.trf.xlu0
      %v571 = vpop.trf.xlu0
      %v572 = vpop.trf.xlu0
      %v573 = vpop.trf.xlu0
      %v574 = vpop.trf.xlu0
      %v575 = vpop.trf.xlu0
      %v576 = vpop.trf.xlu0
      %v577 = vpop.trf.xlu0
      %v578 = vpop.trf.xlu0
      %v579 = vmax.f32 %v531, %v533
      %v580 = vmax.f32 %v532, %v534
      %v581 = vmax.f32 %v535, %v537
      %v582 = vmax.f32 %v536, %v538
      %v583 = vmax.f32 %v539, %v541
      %v584 = vmax.f32 %v540, %v542
      %v585 = vmax.f32 %v543, %v545
      %v586 = vmax.f32 %v544, %v546
      %v587 = vmax.f32 %v563, %v565
      %v588 = vmax.f32 %v564, %v566
      %v589 = vmax.f32 %v567, %v569
      %v590 = vmax.f32 %v568, %v570
      %v591 = vmax.f32 %v571, %v573
      %v592 = vmax.f32 %v572, %v574
      %v593 = vmax.f32 %v575, %v577
      %v594 = vmax.f32 %v576, %v578
      %vm595 = vcmask 31744
      %596 = vst.msk [vmem:[#allocation2] sm:$0xff] %vm595, %v579
      %597 = vst.msk [vmem:[#allocation2 + $0x8] sm:$0xff] %vm595, %v580
      %598 = vst.msk [vmem:[#allocation2 + $0x10] sm:$0xff] %vm595, %v581
      %599 = vst.msk [vmem:[#allocation2 + $0x18] sm:$0xff] %vm595, %v582
      %600 = vst.msk [vmem:[#allocation2 + $0x20] sm:$0xff] %vm595, %v583
      %601 = vst.msk [vmem:[#allocation2 + $0x28] sm:$0xff] %vm595, %v584
      %602 = vst.msk [vmem:[#allocation2 + $0x30] sm:$0xff] %vm595, %v585
      %603 = vst.msk [vmem:[#allocation2 + $0x38] sm:$0xff] %vm595, %v586
      %604 = vst.msk [vmem:[#allocation2 + $0x40] sm:$0xff] %vm595, %v587
      %605 = vst.msk [vmem:[#allocation2 + $0x48] sm:$0xff] %vm595, %v588
      %606 = vst.msk [vmem:[#allocation2 + $0x50] sm:$0xff] %vm595, %v589
      %607 = vst.msk [vmem:[#allocation2 + $0x58] sm:$0xff] %vm595, %v590
      %608 = vst.msk [vmem:[#allocation2 + $0x60] sm:$0xff] %vm595, %v591
      %609 = vst.msk [vmem:[#allocation2 + $0x68] sm:$0xff] %vm595, %v592
      %610 = vst.msk [vmem:[#allocation2 + $0x70] sm:$0xff] %vm595, %v593
      %611 = vst.msk [vmem:[#allocation2 + $0x78] sm:$0xff] %vm595, %v594
      %v612 = vld [vmem:[#allocation2] ss:$2 sm:$0xff]
      %s613 = scalar_lea.vmem [#allocation2], 16
      %v614 = vld [vmem:[%s613] ss:$2 sm:$0xff]
      %s615 = scalar_lea.vmem [#allocation2], 32
      %v616 = vld [vmem:[%s615] ss:$2 sm:$0xff]
      %s617 = scalar_lea.vmem [#allocation2], 48
      %v618 = vld [vmem:[%s617] ss:$2 sm:$0xff]
      %s619 = scalar_lea.vmem [#allocation2], 64
      %v620 = vld [vmem:[%s619] ss:$2 sm:$0xff]
      %s621 = scalar_lea.vmem [#allocation2], 80
      %v622 = vld [vmem:[%s621] ss:$2 sm:$0xff]
      %s623 = scalar_lea.vmem [#allocation2], 96
      %v624 = vld [vmem:[%s623] ss:$2 sm:$0xff]
      %s625 = scalar_lea.vmem [#allocation2], 112
      %v626 = vld [vmem:[%s625] ss:$2 sm:$0xff]
      %s627 = scalar_lea.vmem [#allocation2], 1
      %v628 = vld [vmem:[%s627] ss:$2 sm:$0xff]
      %s629 = scalar_lea.vmem [#allocation2], 17
      %v630 = vld [vmem:[%s629] ss:$2 sm:$0xff]
      %s631 = scalar_lea.vmem [#allocation2], 33
      %v632 = vld [vmem:[%s631] ss:$2 sm:$0xff]
      %s633 = scalar_lea.vmem [#allocation2], 49
      %v634 = vld [vmem:[%s633] ss:$2 sm:$0xff]
      %s635 = scalar_lea.vmem [#allocation2], 65
      %v636 = vld [vmem:[%s635] ss:$2 sm:$0xff]
      %s637 = scalar_lea.vmem [#allocation2], 81
      %v638 = vld [vmem:[%s637] ss:$2 sm:$0xff]
      %s639 = scalar_lea.vmem [#allocation2], 97
      %v640 = vld [vmem:[%s639] ss:$2 sm:$0xff]
      %s641 = scalar_lea.vmem [#allocation2], 113
      %v642 = vld [vmem:[%s641] ss:$2 sm:$0xff]
      %v643 = vmax.f32 %v612, %v628
      %v644 = vmax.f32 %v614, %v630
      %v645 = vmax.f32 %v616, %v632
      %v646 = vmax.f32 %v618, %v634
      %v647 = vmax.f32 %v620, %v636
      %v648 = vmax.f32 %v622, %v638
      %v649 = vmax.f32 %v624, %v640
      %v650 = vmax.f32 %v626, %v642
      %651 = vxpose.xlu0.b32.start [1/16] %v643, 128
      %652 = vxpose.xlu0.b32.cont [2/16] %v644, 128
      %653 = vxpose.xlu0.b32.cont [3/16] %v645, 128
      %654 = vxpose.xlu0.b32.cont [4/16] %v646, 128
      %655 = vxpose.xlu0.b32.cont [5/16] %v647, 128
      %656 = vxpose.xlu0.b32.cont [6/16] %v648, 128
      %657 = vxpose.xlu0.b32.cont [7/16] %v649, 128
      %658 = vxpose.xlu0.b32.cont [8/16] %v650, 128
      %659 = vxpose.xlu0.b32.cont [9/16] 0.0, 128
      %660 = vxpose.xlu0.b32.cont [10/16] 0.0, 128
      %661 = vxpose.xlu0.b32.cont [11/16] 0.0, 128
      %662 = vxpose.xlu0.b32.cont [12/16] 0.0, 128
      %663 = vxpose.xlu0.b32.cont [13/16] 0.0, 128
      %664 = vxpose.xlu0.b32.cont [14/16] 0.0, 128
      %665 = vxpose.xlu0.b32.cont [15/16] 0.0, 128
      %666 = vxpose.xlu0.b32.end [16/16] 0.0, 128
      %v667 = vpop.trf.xlu0
      %v668 = vpop.trf.xlu0
      %v669 = vpop.trf.xlu0
      %v670 = vpop.trf.xlu0
      %v671 = vpop.trf.xlu0
      %v672 = vpop.trf.xlu0
      %v673 = vpop.trf.xlu0
      %v674 = vpop.trf.xlu0
      %v675 = vpop.trf.xlu0
      %v676 = vpop.trf.xlu0
      %v677 = vpop.trf.xlu0
      %v678 = vpop.trf.xlu0
      %v679 = vpop.trf.xlu0
      %v680 = vpop.trf.xlu0
      %v681 = vpop.trf.xlu0
      %v682 = vpop.trf.xlu0
      %v683 = vld [vmem:[%s13] sm:$0x1]
      %v684 = vld [vmem:[%s13 + $0x1] sm:$0x1]
      %v685 = vld [vmem:[%s13 + $0x2] sm:$0x1]
      %v686 = vld [vmem:[%s13 + $0x3] sm:$0x1]
      %vm687 = vcmask 1048064
      %688 = vrot.lane.b32.xlu0 %v667, 64
      %v689 = vpop.permute.xlu0 %688
      %v690 = vsel %vm687, %v689, %v667
      %691 = vrot.lane.b32.xlu0 %v690, 64
      %v692 = vpop.permute.xlu0 %691
      %v693 = vsel %vm687, %v692, %v667
      %v694 = vlaneseq
      %v695 = vshrl.u32 %v694, 7
      %v696 = vsub.s32 0, %v695
      %v697 = vrot.slane %v683, %v696
      %699 = vrot.lane.b32.xlu0 %v697, 63
      %v700 = vpop.permute.xlu0 %699
      %v702 = vmul.f32 %v693, %v700
      %v703 = vlaneseq
      %v704 = vshrl.u32 %v703, 7
      %v705 = vsub.s32 0, %v704
      %v706 = vrot.slane %v684, %v705
      %708 = vrot.lane.b32.xlu0 %v706, 1
      %v709 = vpop.permute.xlu0 %708
      %v711 = vmul.f32 %v693, %v709
      %v713 = vrot.slane %v667, 4
      %714 = vrot.lane.b32.xlu0 %v713, 63
      %v715 = vpop.permute.xlu0 %714
      %718 = vrot.lane.b32.xlu0 %v711, 62
      %v719 = vpop.permute.xlu0 %718
      %vm721 = vcmask 1043456
      %v722 = vsel %vm721, %v702, %v715
      %724 = vrot.lane.b32.xlu0 %v722, 65
      %v725 = vpop.permute.xlu0 %724
      %726 = vrot.lane.b32.xlu0 %v719, 65
      %v727 = vpop.permute.xlu0 %726
      %730 = vrot.lane.b32.xlu0 %v725, 64
      %v731 = vpop.permute.xlu0 %730
      %v732 = vsel %vm687, %v731, %v725
      %733 = vrot.lane.b32.xlu0 %v727, 64
      %v734 = vpop.permute.xlu0 %733
      %v735 = vsel %vm687, %v734, %v727
      %736 = vrot.lane.b32.xlu0 %v732, 64
      %v737 = vpop.permute.xlu0 %736
      %738 = vrot.lane.b32.xlu0 %v735, 64
      %v739 = vpop.permute.xlu0 %738
      %v740 = vsel %vm687, %v737, %v725
      %v741 = vsel %vm687, %v739, %v727
      %v742 = vlaneseq
      %v743 = vshrl.u32 %v742, 7
      %v744 = vsub.s32 0, %v743
      %v745 = vrot.slane %v685, %v744
      %747 = vrot.lane.b32.xlu0 %v745, 56
      %v748 = vpop.permute.xlu0 %747
      %v750 = vmul.f32 %v740, %v748
      %v751 = vmul.f32 %v741, %v748
      %v752 = vlaneseq
      %v753 = vshrl.u32 %v752, 7
      %v754 = vsub.s32 0, %v753
      %v755 = vrot.slane %v686, %v754
      %757 = vrot.lane.b32.xlu0 %v755, 8
      %v758 = vpop.permute.xlu0 %757
      %v760 = vmul.f32 %v740, %v758
      %v761 = vmul.f32 %v741, %v758
      %s762 = scalar_lea.vmem %s1, 2
      %v763 = vld [vmem:[%s762] sm:$0x3]
      %v764 = vpack.c.bf16 %v719, %v722
      %v765 = vld [vmem:[%s1] sm:$0x3]
      %v766 = vpack.c.bf16 %v751, %v750
      %768 = vrot.lane.b32.xlu0 %v766, 72
      %v769 = vpop.permute.xlu0 %768
      %vm770 = vcmask 97280
      %v772 = vsel %vm770, %v765, 0
      %vm774 = vcmask 1045504
      %v776 = vsel %vm774, %v769, 0
      %778 = vmatprep.subr.bf16.mxu0 0
      %779 = vmatpush1.bf16.msra.mxu0 %v776
      %780 = vmatprep.subr.bf16.mxu0 0
      %781 = vmatpush1.bf16.msra.mxu0 0
      %782 = vmatprep.subr.bf16.mxu0 0
      %783 = vmatpush1.bf16.msra.mxu0 0
      %784 = vmatprep.subr.bf16.mxu0 0
      %785 = vmatpush1.bf16.msra.mxu0 0
      %786 = vmatprep.subr.bf16.mxu0 0
      %787 = vmatpush1.bf16.msra.mxu0 0
      %788 = vmatprep.subr.bf16.mxu0 0
      %789 = vmatpush1.bf16.msra.mxu0 0
      %790 = vmatprep.subr.bf16.mxu0 0
      %791 = vmatpush1.bf16.msra.mxu0 0
      %792 = vmatprep.subr.bf16.mxu0 0
      %793 = vmatpush1.bf16.msra.mxu0 0
      %794 = vmatprep.subr.bf16.mxu0 0
      %795 = vmatpush1.bf16.msra.mxu0 0
      %796 = vmatprep.subr.bf16.mxu0 0
      %797 = vmatpush1.bf16.msra.mxu0 0
      %798 = vmatprep.subr.bf16.mxu0 0
      %799 = vmatpush1.bf16.msra.mxu0 0
      %800 = vmatprep.subr.bf16.mxu0 0
      %801 = vmatpush1.bf16.msra.mxu0 0
      %802 = vmatprep.subr.bf16.mxu0 0
      %803 = vmatpush1.bf16.msra.mxu0 0
      %804 = vmatprep.subr.bf16.mxu0 0
      %805 = vmatpush1.bf16.msra.mxu0 0
      %806 = vmatprep.subr.bf16.mxu0 0
      %807 = vmatpush1.bf16.msra.mxu0 0
      %808 = vmatprep.subr.bf16.mxu0 0
      %809 = vmatpush1.bf16.msra.mxu0 0
      %810 = vmatprep.mubr.bf16.mxu0 0
      %811 = vmatmul.mubr.bf16.gmra.mrb[0].mxu0 %v772
      %v812 = vpop.f32.mrb[0].mxu0
      %v813 = vadd.f32 0.0, %v812
      %v814 = vpop.f32.mrb[0].mxu0
      %v815 = vpop.f32.mrb[0].mxu0
      %v816 = vpop.f32.mrb[0].mxu0
      %817 = vdwg.mxu0
      %819 = vrot.lane.b32.xlu0 %v764, 65
      %v820 = vpop.permute.xlu0 %819
      %v822 = vsel %vm770, %v763, 0
      %v825 = vsel %vm774, %v820, 0
      %827 = vmatprep.subr.bf16.mxu0 0
      %828 = vmatpush1.bf16.msra.mxu0 %v825
      %829 = vmatprep.subr.bf16.mxu0 0
      %830 = vmatpush1.bf16.msra.mxu0 0
      %831 = vmatprep.subr.bf16.mxu0 0
      %832 = vmatpush1.bf16.msra.mxu0 0
      %833 = vmatprep.subr.bf16.mxu0 0
      %834 = vmatpush1.bf16.msra.mxu0 0
      %835 = vmatprep.subr.bf16.mxu0 0
      %836 = vmatpush1.bf16.msra.mxu0 0
      %837 = vmatprep.subr.bf16.mxu0 0
      %838 = vmatpush1.bf16.msra.mxu0 0
      %839 = vmatprep.subr.bf16.mxu0 0
      %840 = vmatpush1.bf16.msra.mxu0 0
      %841 = vmatprep.subr.bf16.mxu0 0
      %842 = vmatpush1.bf16.msra.mxu0 0
      %843 = vmatprep.subr.bf16.mxu0 0
      %844 = vmatpush1.bf16.msra.mxu0 0
      %845 = vmatprep.subr.bf16.mxu0 0
      %846 = vmatpush1.bf16.msra.mxu0 0
      %847 = vmatprep.subr.bf16.mxu0 0
      %848 = vmatpush1.bf16.msra.mxu0 0
      %849 = vmatprep.subr.bf16.mxu0 0
      %850 = vmatpush1.bf16.msra.mxu0 0
      %851 = vmatprep.subr.bf16.mxu0 0
      %852 = vmatpush1.bf16.msra.mxu0 0
      %853 = vmatprep.subr.bf16.mxu0 0
      %854 = vmatpush1.bf16.msra.mxu0 0
      %855 = vmatprep.subr.bf16.mxu0 0
      %856 = vmatpush1.bf16.msra.mxu0 0
      %857 = vmatprep.subr.bf16.mxu0 0
      %858 = vmatpush1.bf16.msra.mxu0 0
      %859 = vmatprep.mubr.bf16.mxu0 0
      %860 = vmatmul.mubr.bf16.gmra.mrb[0].mxu0 %v822
      %v861 = vpop.f32.mrb[0].mxu0
      %v862 = vadd.f32 %v813, %v861
      %v863 = vpop.f32.mrb[0].mxu0
      %v864 = vpop.f32.mrb[0].mxu0
      %v865 = vpop.f32.mrb[0].mxu0
      %866 = vdwg.mxu0
      %s867 = scalar_lea.vmem %s1, 4
      %v868 = vld [vmem:[%s867] sm:$0x3]
      %v869 = vpack.c.bf16 %v761, %v760
      %871 = vrot.lane.b32.xlu0 %v869, 120
      %v872 = vpop.permute.xlu0 %871
      %v874 = vsel %vm770, %v868, 0
      %v877 = vsel %vm774, %v872, 0
      %879 = vmatprep.subr.bf16.mxu0 0
      %880 = vmatpush1.bf16.msra.mxu0 %v877
      %881 = vmatprep.subr.bf16.mxu0 0
      %882 = vmatpush1.bf16.msra.mxu0 0
      %883 = vmatprep.subr.bf16.mxu0 0
      %884 = vmatpush1.bf16.msra.mxu0 0
      %885 = vmatprep.subr.bf16.mxu0 0
      %886 = vmatpush1.bf16.msra.mxu0 0
      %887 = vmatprep.subr.bf16.mxu0 0
      %888 = vmatpush1.bf16.msra.mxu0 0
      %889 = vmatprep.subr.bf16.mxu0 0
      %890 = vmatpush1.bf16.msra.mxu0 0
      %891 = vmatprep.subr.bf16.mxu0 0
      %892 = vmatpush1.bf16.msra.mxu0 0
      %893 = vmatprep.subr.bf16.mxu0 0
      %894 = vmatpush1.bf16.msra.mxu0 0
      %895 = vmatprep.subr.bf16.mxu0 0
      %896 = vmatpush1.bf16.msra.mxu0 0
      %897 = vmatprep.subr.bf16.mxu0 0
      %898 = vmatpush1.bf16.msra.mxu0 0
      %899 = vmatprep.subr.bf16.mxu0 0
      %900 = vmatpush1.bf16.msra.mxu0 0
      %901 = vmatprep.subr.bf16.mxu0 0
      %902 = vmatpush1.bf16.msra.mxu0 0
      %903 = vmatprep.subr.bf16.mxu0 0
      %904 = vmatpush1.bf16.msra.mxu0 0
      %905 = vmatprep.subr.bf16.mxu0 0
      %906 = vmatpush1.bf16.msra.mxu0 0
      %907 = vmatprep.subr.bf16.mxu0 0
      %908 = vmatpush1.bf16.msra.mxu0 0
      %909 = vmatprep.subr.bf16.mxu0 0
      %910 = vmatpush1.bf16.msra.mxu0 0
      %911 = vmatprep.mubr.bf16.mxu0 0
      %912 = vmatmul.mubr.bf16.gmra.mrb[0].mxu0 %v874
      %v913 = vpop.f32.mrb[0].mxu0
      %v914 = vadd.f32 0.0, %v913
      %v915 = vpop.f32.mrb[0].mxu0
      %v916 = vpop.f32.mrb[0].mxu0
      %v917 = vpop.f32.mrb[0].mxu0
      %918 = vdwg.mxu0
      %v919 = vadd.f32 %v862, %v914
      %vm920 = vcmask 519168
      %v921 = vsel %vm920, %v919, 0.0
      %922 = vadd.xlane.f32.xlu0 %v921
      %v923 = vpop.xlane.xlu0 %922
      %v924 = vrot.slane %v923, 4
      %v925 = vadd.f32 %v923, %v924
      %v926 = vrot.slane %v925, 2
      %v927 = vadd.f32 %v925, %v926
      %v928 = vrot.slane %v927, 1
      %v929 = vadd.f32 %v927, %v928
      %s930 = vtos %v929
      %v931 = vmul.f32 %v919, %v919
      %v932 = vsel %vm920, %v931, 0.0
      %933 = vadd.xlane.f32.xlu0 %v932
      %v934 = vpop.xlane.xlu0 %933
      %v935 = vrot.slane %v934, 4
      %v936 = vadd.f32 %v934, %v935
      %v937 = vrot.slane %v936, 2
      %v938 = vadd.f32 %v936, %v937
      %v939 = vrot.slane %v938, 1
      %v940 = vadd.f32 %v938, %v939
      %s941 = vtos %v940
      %v942 = vrcp.pop 256.0
      %s943 = vtos %v942
      %s944 = smul.f32 %s930, %s943
      %v945 = vrcp.pop 256.0
      %s946 = vtos %v945
      %s947 = smul.f32 %s941, %s946
      %s948 = smul.f32 %s944, %s944
      %s949 = ssub.f32 %s947, %s948
      %v950 = vstv %s944
      %v951 = vsub.f32 %v919, %v950
      %s952 = sadd.f32 %s949, 1e-05
      %v953 = vstv %s952
      %v954 = vrsqrt.pop %v953
      %s955 = vtos %v954
      %v956 = vstv %s955
      %v957 = vmul.f32 %v951, %v956
      %v958 = vld [vmem:[%s2] sm:$0xf]
      %960 = vset.pattern.permute.xlu0 0
      %961 = vperm.xlu0 %960, %v958
      %v962 = vpop.permute.xlu0 %961
      %v964 = vmul.f32 %v957, %v962
      %v965 = vld [vmem:[%s3] sm:$0xf]
      %967 = vset.pattern.permute.xlu0 0
      %968 = vperm.xlu0 %967, %v965
      %v969 = vpop.permute.xlu0 %968
      %v971 = vadd.f32 %v964, %v969
      %v972 = vmul.f32 %v971, 0.5
      %v973 = vmul.f32 %v971, 0.70710677
      %v974 = vand.u32 2147483647, %v973
      %v975 = vmul.f32 %v974, 0.3275911
      %v976 = vadd.f32 %v975, 1.0
      %v977 = vrcp.pop %v976
      %v978 = vmul.f32 1.0, %v977
      %v979 = vmul.f32 %v978, 1.0614054
      %v980 = vadd.f32 %v979, -1.4531521
      %v981 = vmul.f32 %v980, %v978
      %v982 = vadd.f32 %v981, 1.4214138
      %v983 = vmul.f32 %v982, %v978
      %v984 = vadd.f32 %v983, -0.28449672
      %v985 = vmul.f32 %v984, %v978
      %v986 = vadd.f32 %v985, 0.2548296
      %v987 = vmul.f32 %v986, %v978
      %v988 = vsub.f32 0.0, %v974
      %v989 = vmul.f32 %v988, %v974
      %v990 = vmul.f32 %v989, 1.442695
      %v991 = vpow.pop %v990
      %v992 = vmul.f32 %v987, %v991
      %v993 = vsub.f32 1.0, %v992
      %vm994 = vcmp.ge.f32.partialorder %v973, 0.0
      %v995 = vsub.f32 0.0, %v993
      %v996 = vsel %vm994, %v993, %v995
      %v997 = vadd.f32 %v996, 1.0
      %v998 = vmul.f32 %v972, %v997
      %999 = vrot.lane.b32.xlu0 %v998, 64
      %v1000 = vpop.permute.xlu0 %999
      %v1001 = vsel %vm687, %v1000, %v998
      %1002 = vrot.lane.b32.xlu0 %v1001, 64
      %v1003 = vpop.permute.xlu0 %1002
      %v1004 = vsel %vm687, %v1003, %v998
      %v1005 = vmul.f32 %v1004, %v700
      %v1006 = vmul.f32 %v1004, %v709
      %v1008 = vrot.slane %v998, 4
      %1009 = vrot.lane.b32.xlu0 %v1008, 63
      %v1010 = vpop.permute.xlu0 %1009
      %1013 = vrot.lane.b32.xlu0 %v1006, 62
      %v1014 = vpop.permute.xlu0 %1013
      %v1016 = vsel %vm721, %v1005, %v1010
      %1018 = vrot.lane.b32.xlu0 %v1016, 65
      %v1019 = vpop.permute.xlu0 %1018
      %1020 = vrot.lane.b32.xlu0 %v1014, 65
      %v1021 = vpop.permute.xlu0 %1020
      %1024 = vrot.lane.b32.xlu0 %v1019, 64
      %v1025 = vpop.permute.xlu0 %1024
      %v1026 = vsel %vm687, %v1025, %v1019
      %1027 = vrot.lane.b32.xlu0 %v1021, 64
      %v1028 = vpop.permute.xlu0 %1027
      %v1029 = vsel %vm687, %v1028, %v1021
      %1030 = vrot.lane.b32.xlu0 %v1026, 64
      %v1031 = vpop.permute.xlu0 %1030
      %1032 = vrot.lane.b32.xlu0 %v1029, 64
      %v1033 = vpop.permute.xlu0 %1032
      %v1034 = vsel %vm687, %v1031, %v1019
      %v1035 = vsel %vm687, %v1033, %v1021
      %v1036 = vmul.f32 %v1034, %v748
      %v1037 = vmul.f32 %v1035, %v748
      %v1038 = vmul.f32 %v1034, %v758
      %v1039 = vmul.f32 %v1035, %v758
      %s1040 = scalar_lea.vmem %s4, 2
      %v1041 = vld [vmem:[%s1040] sm:$0x3]
      %v1042 = vpack.c.bf16 %v1014, %v1016
      %v1043 = vld [vmem:[%s4] sm:$0x3]
      %v1044 = vpack.c.bf16 %v1037, %v1036
      %1046 = vrot.lane.b32.xlu0 %v1044, 72
      %v1047 = vpop.permute.xlu0 %1046
      %v1049 = vsel %vm770, %v1043, 0
      %v1052 = vsel %vm774, %v1047, 0
      %1054 = vmatprep.subr.bf16.mxu0 0
      %1055 = vmatpush1.bf16.msra.mxu0 %v1052
      %1056 = vmatprep.subr.bf16.mxu0 0
      %1057 = vmatpush1.bf16.msra.mxu0 0
      %1058 = vmatprep.subr.bf16.mxu0 0
      %1059 = vmatpush1.bf16.msra.mxu0 0
      %1060 = vmatprep.subr.bf16.mxu0 0
      %1061 = vmatpush1.bf16.msra.mxu0 0
      %1062 = vmatprep.subr.bf16.mxu0 0
      %1063 = vmatpush1.bf16.msra.mxu0 0
      %1064 = vmatprep.subr.bf16.mxu0 0
      %1065 = vmatpush1.bf16.msra.mxu0 0
      %1066 = vmatprep.subr.bf16.mxu0 0
      %1067 = vmatpush1.bf16.msra.mxu0 0
      %1068 = vmatprep.subr.bf16.mxu0 0
      %1069 = vmatpush1.bf16.msra.mxu0 0
      %1070 = vmatprep.subr.bf16.mxu0 0
      %1071 = vmatpush1.bf16.msra.mxu0 0
      %1072 = vmatprep.subr.bf16.mxu0 0
      %1073 = vmatpush1.bf16.msra.mxu0 0
      %1074 = vmatprep.subr.bf16.mxu0 0
      %1075 = vmatpush1.bf16.msra.mxu0 0
      %1076 = vmatprep.subr.bf16.mxu0 0
      %1077 = vmatpush1.bf16.msra.mxu0 0
      %1078 = vmatprep.subr.bf16.mxu0 0
      %1079 = vmatpush1.bf16.msra.mxu0 0
      %1080 = vmatprep.subr.bf16.mxu0 0
      %1081 = vmatpush1.bf16.msra.mxu0 0
      %1082 = vmatprep.subr.bf16.mxu0 0
      %1083 = vmatpush1.bf16.msra.mxu0 0
      %1084 = vmatprep.subr.bf16.mxu0 0
      %1085 = vmatpush1.bf16.msra.mxu0 0
      %1086 = vmatprep.mubr.bf16.mxu0 0
      %1087 = vmatmul.mubr.bf16.gmra.mrb[0].mxu0 %v1049
      %v1088 = vpop.f32.mrb[0].mxu0
      %v1089 = vadd.f32 0.0, %v1088
      %v1090 = vpop.f32.mrb[0].mxu0
      %v1091 = vpop.f32.mrb[0].mxu0
      %v1092 = vpop.f32.mrb[0].mxu0
      %1093 = vdwg.mxu0
      %1095 = vrot.lane.b32.xlu0 %v1042, 65
      %v1096 = vpop.permute.xlu0 %1095
      %v1098 = vsel %vm770, %v1041, 0
      %v1101 = vsel %vm774, %v1096, 0
      %1103 = vmatprep.subr.bf16.mxu0 0
      %1104 = vmatpush1.bf16.msra.mxu0 %v1101
      %1105 = vmatprep.subr.bf16.mxu0 0
      %1106 = vmatpush1.bf16.msra.mxu0 0
      %1107 = vmatprep.subr.bf16.mxu0 0
      %1108 = vmatpush1.bf16.msra.mxu0 0
      %1109 = vmatprep.subr.bf16.mxu0 0
      %1110 = vmatpush1.bf16.msra.mxu0 0
      %1111 = vmatprep.subr.bf16.mxu0 0
      %1112 = vmatpush1.bf16.msra.mxu0 0
      %1113 = vmatprep.subr.bf16.mxu0 0
      %1114 = vmatpush1.bf16.msra.mxu0 0
      %1115 = vmatprep.subr.bf16.mxu0 0
      %1116 = vmatpush1.bf16.msra.mxu0 0
      %1117 = vmatprep.subr.bf16.mxu0 0
      %1118 = vmatpush1.bf16.msra.mxu0 0
      %1119 = vmatprep.subr.bf16.mxu0 0
      %1120 = vmatpush1.bf16.msra.mxu0 0
      %1121 = vmatprep.subr.bf16.mxu0 0
      %1122 = vmatpush1.bf16.msra.mxu0 0
      %1123 = vmatprep.subr.bf16.mxu0 0
      %1124 = vmatpush1.bf16.msra.mxu0 0
      %1125 = vmatprep.subr.bf16.mxu0 0
      %1126 = vmatpush1.bf16.msra.mxu0 0
      %1127 = vmatprep.subr.bf16.mxu0 0
      %1128 = vmatpush1.bf16.msra.mxu0 0
      %1129 = vmatprep.subr.bf16.mxu0 0
      %1130 = vmatpush1.bf16.msra.mxu0 0
      %1131 = vmatprep.subr.bf16.mxu0 0
      %1132 = vmatpush1.bf16.msra.mxu0 0
      %1133 = vmatprep.subr.bf16.mxu0 0
      %1134 = vmatpush1.bf16.msra.mxu0 0
      %1135 = vmatprep.mubr.bf16.mxu0 0
      %1136 = vmatmul.mubr.bf16.gmra.mrb[0].mxu0 %v1098
      %v1137 = vpop.f32.mrb[0].mxu0
      %v1138 = vadd.f32 %v1089, %v1137
      %v1139 = vpop.f32.mrb[0].mxu0
      %v1140 = vpop.f32.mrb[0].mxu0
      %v1141 = vpop.f32.mrb[0].mxu0
      %1142 = vdwg.mxu0
      %s1143 = scalar_lea.vmem %s4, 4
      %v1144 = vld [vmem:[%s1143] sm:$0x3]
      %v1145 = vpack.c.bf16 %v1039, %v1038
      %1147 = vrot.lane.b32.xlu0 %v1145, 120
      %v1148 = vpop.permute.xlu0 %1147
      %v1150 = vsel %vm770, %v1144, 0
      %v1153 = vsel %vm774, %v1148, 0
      %1155 = vmatprep.subr.bf16.mxu0 0
      %1156 = vmatpush1.bf16.msra.mxu0 %v1153
      %1157 = vmatprep.subr.bf16.mxu0 0
      %1158 = vmatpush1.bf16.msra.mxu0 0
      %1159 = vmatprep.subr.bf16.mxu0 0
      %1160 = vmatpush1.bf16.msra.mxu0 0
      %1161 = vmatprep.subr.bf16.mxu0 0
      %1162 = vmatpush1.bf16.msra.mxu0 0
      %1163 = vmatprep.subr.bf16.mxu0 0
      %1164 = vmatpush1.bf16.msra.mxu0 0
      %1165 = vmatprep.subr.bf16.mxu0 0
      %1166 = vmatpush1.bf16.msra.mxu0 0
      %1167 = vmatprep.subr.bf16.mxu0 0
      %1168 = vmatpush1.bf16.msra.mxu0 0
      %1169 = vmatprep.subr.bf16.mxu0 0
      %1170 = vmatpush1.bf16.msra.mxu0 0
      %1171 = vmatprep.subr.bf16.mxu0 0
      %1172 = vmatpush1.bf16.msra.mxu0 0
      %1173 = vmatprep.subr.bf16.mxu0 0
      %1174 = vmatpush1.bf16.msra.mxu0 0
      %1175 = vmatprep.subr.bf16.mxu0 0
      %1176 = vmatpush1.bf16.msra.mxu0 0
      %1177 = vmatprep.subr.bf16.mxu0 0
      %1178 = vmatpush1.bf16.msra.mxu0 0
      %1179 = vmatprep.subr.bf16.mxu0 0
      %1180 = vmatpush1.bf16.msra.mxu0 0
      %1181 = vmatprep.subr.bf16.mxu0 0
      %1182 = vmatpush1.bf16.msra.mxu0 0
      %1183 = vmatprep.subr.bf16.mxu0 0
      %1184 = vmatpush1.bf16.msra.mxu0 0
      %1185 = vmatprep.subr.bf16.mxu0 0
      %1186 = vmatpush1.bf16.msra.mxu0 0
      %1187 = vmatprep.mubr.bf16.mxu0 0
      %1188 = vmatmul.mubr.bf16.gmra.mrb[0].mxu0 %v1150
      %v1189 = vpop.f32.mrb[0].mxu0
      %v1190 = vadd.f32 0.0, %v1189
      %v1191 = vpop.f32.mrb[0].mxu0
      %v1192 = vpop.f32.mrb[0].mxu0
      %v1193 = vpop.f32.mrb[0].mxu0
      %1194 = vdwg.mxu0
      %v1195 = vadd.f32 %v1138, %v1190
      %v1196 = vsel %vm920, %v1195, 0.0
      %1197 = vadd.xlane.f32.xlu0 %v1196
      %v1198 = vpop.xlane.xlu0 %1197
      %v1199 = vrot.slane %v1198, 4
      %v1200 = vadd.f32 %v1198, %v1199
      %v1201 = vrot.slane %v1200, 2
      %v1202 = vadd.f32 %v1200, %v1201
      %v1203 = vrot.slane %v1202, 1
      %v1204 = vadd.f32 %v1202, %v1203
      %s1205 = vtos %v1204
      %v1206 = vmul.f32 %v1195, %v1195
      %v1207 = vsel %vm920, %v1206, 0.0
      %1208 = vadd.xlane.f32.xlu0 %v1207
      %v1209 = vpop.xlane.xlu0 %1208
      %v1210 = vrot.slane %v1209, 4
      %v1211 = vadd.f32 %v1209, %v1210
      %v1212 = vrot.slane %v1211, 2
      %v1213 = vadd.f32 %v1211, %v1212
      %v1214 = vrot.slane %v1213, 1
      %v1215 = vadd.f32 %v1213, %v1214
      %s1216 = vtos %v1215
      %v1217 = vrcp.pop 256.0
      %s1218 = vtos %v1217
      %s1219 = smul.f32 %s1205, %s1218
      %v1220 = vrcp.pop 256.0
      %s1221 = vtos %v1220
      %s1222 = smul.f32 %s1216, %s1221
      %s1223 = smul.f32 %s1219, %s1219
      %s1224 = ssub.f32 %s1222, %s1223
      %v1225 = vstv %s1219
      %v1226 = vsub.f32 %v1195, %v1225
      %s1227 = sadd.f32 %s1224, 1e-05
      %v1228 = vstv %s1227
      %v1229 = vrsqrt.pop %v1228
      %s1230 = vtos %v1229
      %v1231 = vstv %s1230
      %v1232 = vmul.f32 %v1226, %v1231
      %v1233 = vld [vmem:[%s5] sm:$0xf]
      %1235 = vset.pattern.permute.xlu0 0
      %1236 = vperm.xlu0 %1235, %v1233
      %v1237 = vpop.permute.xlu0 %1236
      %v1239 = vmul.f32 %v1232, %v1237
      %v1240 = vld [vmem:[%s6] sm:$0xf]
      %1242 = vset.pattern.permute.xlu0 0
      %1243 = vperm.xlu0 %1242, %v1240
      %v1244 = vpop.permute.xlu0 %1243
      %v1246 = vadd.f32 %v1239, %v1244
      %v1247 = vadd.f32 %v667, %v1246
      %v1248 = vmul.f32 %v1247, 0.5
      %v1249 = vmul.f32 %v1247, 0.70710677
      %v1250 = vand.u32 2147483647, %v1249
      %v1251 = vmul.f32 %v1250, 0.3275911
      %v1252 = vadd.f32 %v1251, 1.0
      %v1253 = vrcp.pop %v1252
      %v1254 = vmul.f32 1.0, %v1253
      %v1255 = vmul.f32 %v1254, 1.0614054
      %v1256 = vadd.f32 %v1255, -1.4531521
      %v1257 = vmul.f32 %v1256, %v1254
      %v1258 = vadd.f32 %v1257, 1.4214138
      %v1259 = vmul.f32 %v1258, %v1254
      %v1260 = vadd.f32 %v1259, -0.28449672
      %v1261 = vmul.f32 %v1260, %v1254
      %v1262 = vadd.f32 %v1261, 0.2548296
      %v1263 = vmul.f32 %v1262, %v1254
      %v1264 = vsub.f32 0.0, %v1250
      %v1265 = vmul.f32 %v1264, %v1250
      %v1266 = vmul.f32 %v1265, 1.442695
      %v1267 = vpow.pop %v1266
      %v1268 = vmul.f32 %v1263, %v1267
      %v1269 = vsub.f32 1.0, %v1268
      %vm1270 = vcmp.ge.f32.partialorder %v1249, 0.0
      %v1271 = vsub.f32 0.0, %v1269
      %v1272 = vsel %vm1270, %v1269, %v1271
      %v1273 = vadd.f32 %v1272, 1.0
      %v1274 = vmul.f32 %v1248, %v1273
      %1275 = vrot.lane.b32.xlu0 %v1274, 64
      %v1276 = vpop.permute.xlu0 %1275
      %v1277 = vsel %vm687, %v1276, %v1274
      %1278 = vrot.lane.b32.xlu0 %v1277, 64
      %v1279 = vpop.permute.xlu0 %1278
      %v1280 = vsel %vm687, %v1279, %v1274
      %v1281 = vmul.f32 %v1280, %v700
      %v1282 = vmul.f32 %v1280, %v709
      %v1284 = vrot.slane %v1274, 4
      %1285 = vrot.lane.b32.xlu0 %v1284, 63
      %v1286 = vpop.permute.xlu0 %1285
      %1289 = vrot.lane.b32.xlu0 %v1282, 62
      %v1290 = vpop.permute.xlu0 %1289
      %v1292 = vsel %vm721, %v1281, %v1286
      %1294 = vrot.lane.b32.xlu0 %v1292, 65
      %v1295 = vpop.permute.xlu0 %1294
      %1296 = vrot.lane.b32.xlu0 %v1290, 65
      %v1297 = vpop.permute.xlu0 %1296
      %1300 = vrot.lane.b32.xlu0 %v1295, 64
      %v1301 = vpop.permute.xlu0 %1300
      %v1302 = vsel %vm687, %v1301, %v1295
      %1303 = vrot.lane.b32.xlu0 %v1297, 64
      %v1304 = vpop.permute.xlu0 %1303
      %v1305 = vsel %vm687, %v1304, %v1297
      %1306 = vrot.lane.b32.xlu0 %v1302, 64
      %v1307 = vpop.permute.xlu0 %1306
      %1308 = vrot.lane.b32.xlu0 %v1305, 64
      %v1309 = vpop.permute.xlu0 %1308
      %v1310 = vsel %vm687, %v1307, %v1295
      %v1311 = vsel %vm687, %v1309, %v1297
      %v1312 = vmul.f32 %v1310, %v748
      %v1313 = vmul.f32 %v1311, %v748
      %v1314 = vmul.f32 %v1310, %v758
      %v1315 = vmul.f32 %v1311, %v758
      %s1316 = scalar_lea.vmem %s7, 4
      %v1317 = vld [vmem:[%s1316] sm:$0xf]
      %v1318 = vpack.c.bf16 %v1290, %v1292
      %v1319 = vld [vmem:[%s7] sm:$0xf]
      %v1320 = vpack.c.bf16 %v1313, %v1312
      %1322 = vrot.lane.b32.xlu0 %v1320, 72
      %v1323 = vpop.permute.xlu0 %1322
      %v1325 = vsel %vm770, %v1319, 0
      %v1328 = vsel %vm774, %v1323, 0
      %1330 = vmatprep.subr.bf16.mxu0 0
      %1331 = vmatpush1.bf16.msra.mxu0 %v1328
      %1332 = vmatprep.subr.bf16.mxu0 0
      %1333 = vmatpush1.bf16.msra.mxu0 0
      %1334 = vmatprep.subr.bf16.mxu0 0
      %1335 = vmatpush1.bf16.msra.mxu0 0
      %1336 = vmatprep.subr.bf16.mxu0 0
      %1337 = vmatpush1.bf16.msra.mxu0 0
      %1338 = vmatprep.subr.bf16.mxu0 0
      %1339 = vmatpush1.bf16.msra.mxu0 0
      %1340 = vmatprep.subr.bf16.mxu0 0
      %1341 = vmatpush1.bf16.msra.mxu0 0
      %1342 = vmatprep.subr.bf16.mxu0 0
      %1343 = vmatpush1.bf16.msra.mxu0 0
      %1344 = vmatprep.subr.bf16.mxu0 0
      %1345 = vmatpush1.bf16.msra.mxu0 0
      %1346 = vmatprep.subr.bf16.mxu0 0
      %1347 = vmatpush1.bf16.msra.mxu0 0
      %1348 = vmatprep.subr.bf16.mxu0 0
      %1349 = vmatpush1.bf16.msra.mxu0 0
      %1350 = vmatprep.subr.bf16.mxu0 0
      %1351 = vmatpush1.bf16.msra.mxu0 0
      %1352 = vmatprep.subr.bf16.mxu0 0
      %1353 = vmatpush1.bf16.msra.mxu0 0
      %1354 = vmatprep.subr.bf16.mxu0 0
      %1355 = vmatpush1.bf16.msra.mxu0 0
      %1356 = vmatprep.subr.bf16.mxu0 0
      %1357 = vmatpush1.bf16.msra.mxu0 0
      %1358 = vmatprep.subr.bf16.mxu0 0
      %1359 = vmatpush1.bf16.msra.mxu0 0
      %1360 = vmatprep.subr.bf16.mxu0 0
      %1361 = vmatpush1.bf16.msra.mxu0 0
      %1362 = vmatprep.mubr.bf16.mxu0 0
      %1363 = vmatmul.mubr.bf16.gmra.mrb[0].mxu0 %v1325
      %v1364 = vpop.f32.mrb[0].mxu0
      %v1365 = vadd.f32 0.0, %v1364
      %v1366 = vpop.f32.mrb[0].mxu0
      %v1367 = vpop.f32.mrb[0].mxu0
      %v1368 = vpop.f32.mrb[0].mxu0
      %1369 = vdwg.mxu0
      %1371 = vrot.lane.b32.xlu0 %v1318, 65
      %v1372 = vpop.permute.xlu0 %1371
      %v1374 = vsel %vm770, %v1317, 0
      %v1377 = vsel %vm774, %v1372, 0
      %1379 = vmatprep.subr.bf16.mxu0 0
      %1380 = vmatpush1.bf16.msra.mxu0 %v1377
      %1381 = vmatprep.subr.bf16.mxu0 0
      %1382 = vmatpush1.bf16.msra.mxu0 0
      %1383 = vmatprep.subr.bf16.mxu0 0
      %1384 = vmatpush1.bf16.msra.mxu0 0
      %1385 = vmatprep.subr.bf16.mxu0 0
      %1386 = vmatpush1.bf16.msra.mxu0 0
      %1387 = vmatprep.subr.bf16.mxu0 0
      %1388 = vmatpush1.bf16.msra.mxu0 0
      %1389 = vmatprep.subr.bf16.mxu0 0
      %1390 = vmatpush1.bf16.msra.mxu0 0
      %1391 = vmatprep.subr.bf16.mxu0 0
      %1392 = vmatpush1.bf16.msra.mxu0 0
      %1393 = vmatprep.subr.bf16.mxu0 0
      %1394 = vmatpush1.bf16.msra.mxu0 0
      %1395 = vmatprep.subr.bf16.mxu0 0
      %1396 = vmatpush1.bf16.msra.mxu0 0
      %1397 = vmatprep.subr.bf16.mxu0 0
      %1398 = vmatpush1.bf16.msra.mxu0 0
      %1399 = vmatprep.subr.bf16.mxu0 0
      %1400 = vmatpush1.bf16.msra.mxu0 0
      %1401 = vmatprep.subr.bf16.mxu0 0
      %1402 = vmatpush1.bf16.msra.mxu0 0
      %1403 = vmatprep.subr.bf16.mxu0 0
      %1404 = vmatpush1.bf16.msra.mxu0 0
      %1405 = vmatprep.subr.bf16.mxu0 0
      %1406 = vmatpush1.bf16.msra.mxu0 0
      %1407 = vmatprep.subr.bf16.mxu0 0
      %1408 = vmatpush1.bf16.msra.mxu0 0
      %1409 = vmatprep.subr.bf16.mxu0 0
      %1410 = vmatpush1.bf16.msra.mxu0 0
      %1411 = vmatprep.mubr.bf16.mxu0 0
      %1412 = vmatmul.mubr.bf16.gmra.mrb[0].mxu0 %v1374
      %v1413 = vpop.f32.mrb[0].mxu0
      %v1414 = vadd.f32 %v1365, %v1413
      %v1415 = vpop.f32.mrb[0].mxu0
      %v1416 = vpop.f32.mrb[0].mxu0
      %v1417 = vpop.f32.mrb[0].mxu0
      %1418 = vdwg.mxu0
      %s1419 = scalar_lea.vmem %s7, 8
      %v1420 = vld [vmem:[%s1419] sm:$0xf]
      %v1421 = vpack.c.bf16 %v1315, %v1314
      %1423 = vrot.lane.b32.xlu0 %v1421, 120
      %v1424 = vpop.permute.xlu0 %1423
      %v1426 = vsel %vm770, %v1420, 0
      %v1429 = vsel %vm774, %v1424, 0
      %1431 = vmatprep.subr.bf16.mxu0 0
      %1432 = vmatpush1.bf16.msra.mxu0 %v1429
      %1433 = vmatprep.subr.bf16.mxu0 0
      %1434 = vmatpush1.bf16.msra.mxu0 0
      %1435 = vmatprep.subr.bf16.mxu0 0
      %1436 = vmatpush1.bf16.msra.mxu0 0
      %1437 = vmatprep.subr.bf16.mxu0 0
      %1438 = vmatpush1.bf16.msra.mxu0 0
      %1439 = vmatprep.subr.bf16.mxu0 0
      %1440 = vmatpush1.bf16.msra.mxu0 0
      %1441 = vmatprep.subr.bf16.mxu0 0
      %1442 = vmatpush1.bf16.msra.mxu0 0
      %1443 = vmatprep.subr.bf16.mxu0 0
      %1444 = vmatpush1.bf16.msra.mxu0 0
      %1445 = vmatprep.subr.bf16.mxu0 0
      %1446 = vmatpush1.bf16.msra.mxu0 0
      %1447 = vmatprep.subr.bf16.mxu0 0
      %1448 = vmatpush1.bf16.msra.mxu0 0
      %1449 = vmatprep.subr.bf16.mxu0 0
      %1450 = vmatpush1.bf16.msra.mxu0 0
      %1451 = vmatprep.subr.bf16.mxu0 0
      %1452 = vmatpush1.bf16.msra.mxu0 0
      %1453 = vmatprep.subr.bf16.mxu0 0
      %1454 = vmatpush1.bf16.msra.mxu0 0
      %1455 = vmatprep.subr.bf16.mxu0 0
      %1456 = vmatpush1.bf16.msra.mxu0 0
      %1457 = vmatprep.subr.bf16.mxu0 0
      %1458 = vmatpush1.bf16.msra.mxu0 0
      %1459 = vmatprep.subr.bf16.mxu0 0
      %1460 = vmatpush1.bf16.msra.mxu0 0
      %1461 = vmatprep.subr.bf16.mxu0 0
      %1462 = vmatpush1.bf16.msra.mxu0 0
      %1463 = vmatprep.mubr.bf16.mxu0 0
      %1464 = vmatmul.mubr.bf16.gmra.mrb[0].mxu0 %v1426
      %v1465 = vpop.f32.mrb[0].mxu0
      %v1466 = vadd.f32 0.0, %v1465
      %v1467 = vpop.f32.mrb[0].mxu0
      %v1468 = vpop.f32.mrb[0].mxu0
      %v1469 = vpop.f32.mrb[0].mxu0
      %1470 = vdwg.mxu0
      %v1471 = vadd.f32 %v1414, %v1466
      %vm1472 = vcmask 523264
      %v1473 = vsel %vm1472, %v1471, 0.0
      %1474 = vadd.xlane.f32.xlu0 %v1473
      %v1475 = vpop.xlane.xlu0 %1474
      %v1476 = vrot.slane %v1475, 4
      %v1477 = vadd.f32 %v1475, %v1476
      %v1478 = vrot.slane %v1477, 2
      %v1479 = vadd.f32 %v1477, %v1478
      %v1480 = vrot.slane %v1479, 1
      %v1481 = vadd.f32 %v1479, %v1480
      %s1482 = vtos %v1481
      %v1483 = vmul.f32 %v1471, %v1471
      %v1484 = vsel %vm1472, %v1483, 0.0
      %1485 = vadd.xlane.f32.xlu0 %v1484
      %v1486 = vpop.xlane.xlu0 %1485
      %v1487 = vrot.slane %v1486, 4
      %v1488 = vadd.f32 %v1486, %v1487
      %v1489 = vrot.slane %v1488, 2
      %v1490 = vadd.f32 %v1488, %v1489
      %v1491 = vrot.slane %v1490, 1
      %v1492 = vadd.f32 %v1490, %v1491
      %s1493 = vtos %v1492
      %v1494 = vrcp.pop 512.0
      %s1495 = vtos %v1494
      %s1496 = smul.f32 %s1482, %s1495
      %v1497 = vrcp.pop 512.0
      %s1498 = vtos %v1497
      %s1499 = smul.f32 %s1493, %s1498
      %s1500 = smul.f32 %s1496, %s1496
      %s1501 = ssub.f32 %s1499, %s1500
      %v1502 = vstv %s1496
      %v1503 = vsub.f32 %v1471, %v1502
      %s1504 = sadd.f32 %s1501, 1e-05
      %v1505 = vstv %s1504
      %v1506 = vrsqrt.pop %v1505
      %s1507 = vtos %v1506
      %v1508 = vstv %s1507
      %v1509 = vmul.f32 %v1503, %v1508
      %v1510 = vld [vmem:[%s8] sm:$0xff]
      %1512 = vset.pattern.permute.xlu0 0
      %1513 = vperm.xlu0 %1512, %v1510
      %v1514 = vpop.permute.xlu0 %1513
      %v1516 = vmul.f32 %v1509, %v1514
      %v1517 = vld [vmem:[%s9] sm:$0xff]
      %1519 = vset.pattern.permute.xlu0 0
      %1520 = vperm.xlu0 %1519, %v1517
      %v1521 = vpop.permute.xlu0 %1520
      %v1523 = vadd.f32 %v1516, %v1521
      %v1524 = vmul.f32 %v1523, 0.5
      %v1525 = vmul.f32 %v1523, 0.70710677
      %v1526 = vand.u32 2147483647, %v1525
      %v1527 = vmul.f32 %v1526, 0.3275911
      %v1528 = vadd.f32 %v1527, 1.0
      %v1529 = vrcp.pop %v1528
      %v1530 = vmul.f32 1.0, %v1529
      %v1531 = vmul.f32 %v1530, 1.0614054
      %v1532 = vadd.f32 %v1531, -1.4531521
      %v1533 = vmul.f32 %v1532, %v1530
      %v1534 = vadd.f32 %v1533, 1.4214138
      %v1535 = vmul.f32 %v1534, %v1530
      %v1536 = vadd.f32 %v1535, -0.28449672
      %v1537 = vmul.f32 %v1536, %v1530
      %v1538 = vadd.f32 %v1537, 0.2548296
      %v1539 = vmul.f32 %v1538, %v1530
      %v1540 = vsub.f32 0.0, %v1526
      %v1541 = vmul.f32 %v1540, %v1526
      %v1542 = vmul.f32 %v1541, 1.442695
      %v1543 = vpow.pop %v1542
      %v1544 = vmul.f32 %v1539, %v1543
      %v1545 = vsub.f32 1.0, %v1544
      %vm1546 = vcmp.ge.f32.partialorder %v1525, 0.0
      %v1547 = vsub.f32 0.0, %v1545
      %v1548 = vsel %vm1546, %v1545, %v1547
      %v1549 = vadd.f32 %v1548, 1.0
      %v1550 = vmul.f32 %v1524, %v1549
      %1551 = vrot.lane.b32.xlu0 %v1550, 64
      %v1552 = vpop.permute.xlu0 %1551
      %v1553 = vsel %vm687, %v1552, %v1550
      %1554 = vrot.lane.b32.xlu0 %v1553, 64
      %v1555 = vpop.permute.xlu0 %1554
      %v1556 = vsel %vm687, %v1555, %v1550
      %v1557 = vmul.f32 %v1556, %v700
      %v1558 = vmul.f32 %v1556, %v709
      %1560 = vrot.lane.b32.xlu0 %v1550, 63
      %v1561 = vpop.permute.xlu0 %1560
      %1564 = vrot.lane.b32.xlu0 %v1558, 62
      %v1565 = vpop.permute.xlu0 %1564
      %1568 = vrot.lane.b32.xlu0 %v1557, 65
      %v1569 = vpop.permute.xlu0 %1568
      %1570 = vrot.lane.b32.xlu0 %v1561, 65
      %v1571 = vpop.permute.xlu0 %1570
      %1572 = vrot.lane.b32.xlu0 %v1565, 65
      %v1573 = vpop.permute.xlu0 %1572
      %1577 = vrot.lane.b32.xlu0 %v1569, 64
      %v1578 = vpop.permute.xlu0 %1577
      %v1579 = vsel %vm687, %v1578, %v1569
      %1580 = vrot.lane.b32.xlu0 %v1571, 64
      %v1581 = vpop.permute.xlu0 %1580
      %v1582 = vsel %vm687, %v1581, %v1571
      %1583 = vrot.lane.b32.xlu0 %v1573, 64
      %v1584 = vpop.permute.xlu0 %1583
      %v1585 = vsel %vm687, %v1584, %v1573
      %1586 = vrot.lane.b32.xlu0 %v1579, 64
      %v1587 = vpop.permute.xlu0 %1586
      %1588 = vrot.lane.b32.xlu0 %v1582, 64
      %v1589 = vpop.permute.xlu0 %1588
      %1590 = vrot.lane.b32.xlu0 %v1585, 64
      %v1591 = vpop.permute.xlu0 %1590
      %v1592 = vsel %vm687, %v1587, %v1569
      %v1593 = vsel %vm687, %v1589, %v1571
      %v1594 = vsel %vm687, %v1591, %v1573
      %v1595 = vmul.f32 %v1592, %v748
      %v1596 = vmul.f32 %v1593, %v748
      %v1597 = vmul.f32 %v1594, %v748
      %v1598 = vmul.f32 %v1592, %v758
      %v1599 = vmul.f32 %v1593, %v758
      %v1600 = vmul.f32 %v1594, %v758
      %s1601 = scalar_lea.vmem %s10, 4
      %v1602 = vld [vmem:[%s1601] sm:$0xf]
      %v1603 = vpack.c.bf16 %v1561, %v1557
      %v1604 = vpack.c.bf16 %v1565, %v1565
      %v1605 = vld [vmem:[%s10] sm:$0xf]
      %v1606 = vpack.c.bf16 %v1596, %v1595
      %v1607 = vpack.c.bf16 %v1597, %v1597
      %1610 = vrot.lane.b32.xlu0 %v1606, 72
      %v1611 = vpop.permute.xlu0 %1610
      %1612 = vrot.lane.b32.xlu0 %v1607, 72
      %v1613 = vpop.permute.xlu0 %1612
      %vm1615 = vcmask 195584
      %v1617 = vsel %vm1615, %v1605, 0
      %v1620 = vsel %vm721, %v1613, 0
      %1622 = vmatprep.subr.bf16.mxu0 0
      %1623 = vmatpush1.bf16.msra.mxu0 %v1611
      %1624 = vmatprep.subr.bf16.mxu0 0
      %1625 = vmatpush1.bf16.msra.mxu0 %v1620
      %1626 = vmatprep.subr.bf16.mxu0 0
      %1627 = vmatpush1.bf16.msra.mxu0 0
      %1628 = vmatprep.subr.bf16.mxu0 0
      %1629 = vmatpush1.bf16.msra.mxu0 0
      %1630 = vmatprep.subr.bf16.mxu0 0
      %1631 = vmatpush1.bf16.msra.mxu0 0
      %1632 = vmatprep.subr.bf16.mxu0 0
      %1633 = vmatpush1.bf16.msra.mxu0 0
      %1634 = vmatprep.subr.bf16.mxu0 0
      %1635 = vmatpush1.bf16.msra.mxu0 0
      %1636 = vmatprep.subr.bf16.mxu0 0
      %1637 = vmatpush1.bf16.msra.mxu0 0
      %1638 = vmatprep.subr.bf16.mxu0 0
      %1639 = vmatpush1.bf16.msra.mxu0 0
      %1640 = vmatprep.subr.bf16.mxu0 0
      %1641 = vmatpush1.bf16.msra.mxu0 0
      %1642 = vmatprep.subr.bf16.mxu0 0
      %1643 = vmatpush1.bf16.msra.mxu0 0
      %1644 = vmatprep.subr.bf16.mxu0 0
      %1645 = vmatpush1.bf16.msra.mxu0 0
      %1646 = vmatprep.subr.bf16.mxu0 0
      %1647 = vmatpush1.bf16.msra.mxu0 0
      %1648 = vmatprep.subr.bf16.mxu0 0
      %1649 = vmatpush1.bf16.msra.mxu0 0
      %1650 = vmatprep.subr.bf16.mxu0 0
      %1651 = vmatpush1.bf16.msra.mxu0 0
      %1652 = vmatprep.subr.bf16.mxu0 0
      %1653 = vmatpush1.bf16.msra.mxu0 0
      %1654 = vmatprep.mubr.bf16.mxu0 0
      %1655 = vmatmul.mubr.bf16.gmra.mrb[0].mxu0 %v1617
      %v1656 = vpop.f32.mrb[0].mxu0
      %v1657 = vadd.f32 0.0, %v1656
      %v1658 = vpop.f32.mrb[0].mxu0
      %v1659 = vpop.f32.mrb[0].mxu0
      %v1660 = vpop.f32.mrb[0].mxu0
      %1661 = vdwg.mxu0
      %1664 = vrot.lane.b32.xlu0 %v1603, 65
      %v1665 = vpop.permute.xlu0 %1664
      %1666 = vrot.lane.b32.xlu0 %v1604, 65
      %v1667 = vpop.permute.xlu0 %1666
      %v1670 = vsel %vm1615, %v1602, 0
      %v1673 = vsel %vm721, %v1667, 0
      %1675 = vmatprep.subr.bf16.mxu0 0
      %1676 = vmatpush1.bf16.msra.mxu0 %v1665
      %1677 = vmatprep.subr.bf16.mxu0 0
      %1678 = vmatpush1.bf16.msra.mxu0 %v1673
      %1679 = vmatprep.subr.bf16.mxu0 0
      %1680 = vmatpush1.bf16.msra.mxu0 0
      %1681 = vmatprep.subr.bf16.mxu0 0
      %1682 = vmatpush1.bf16.msra.mxu0 0
      %1683 = vmatprep.subr.bf16.mxu0 0
      %1684 = vmatpush1.bf16.msra.mxu0 0
      %1685 = vmatprep.subr.bf16.mxu0 0
      %1686 = vmatpush1.bf16.msra.mxu0 0
      %1687 = vmatprep.subr.bf16.mxu0 0
      %1688 = vmatpush1.bf16.msra.mxu0 0
      %1689 = vmatprep.subr.bf16.mxu0 0
      %1690 = vmatpush1.bf16.msra.mxu0 0
      %1691 = vmatprep.subr.bf16.mxu0 0
      %1692 = vmatpush1.bf16.msra.mxu0 0
      %1693 = vmatprep.subr.bf16.mxu0 0
      %1694 = vmatpush1.bf16.msra.mxu0 0
      %1695 = vmatprep.subr.bf16.mxu0 0
      %1696 = vmatpush1.bf16.msra.mxu0 0
      %1697 = vmatprep.subr.bf16.mxu0 0
      %1698 = vmatpush1.bf16.msra.mxu0 0
      %1699 = vmatprep.subr.bf16.mxu0 0
      %1700 = vmatpush1.bf16.msra.mxu0 0
      %1701 = vmatprep.subr.bf16.mxu0 0
      %1702 = vmatpush1.bf16.msra.mxu0 0
      %1703 = vmatprep.subr.bf16.mxu0 0
      %1704 = vmatpush1.bf16.msra.mxu0 0
      %1705 = vmatprep.subr.bf16.mxu0 0
      %1706 = vmatpush1.bf16.msra.mxu0 0
      %1707 = vmatprep.mubr.bf16.mxu0 0
      %1708 = vmatmul.mubr.bf16.gmra.mrb[0].mxu0 %v1670
      %v1709 = vpop.f32.mrb[0].mxu0
      %v1710 = vadd.f32 %v1657, %v1709
      %v1711 = vpop.f32.mrb[0].mxu0
      %v1712 = vpop.f32.mrb[0].mxu0
      %v1713 = vpop.f32.mrb[0].mxu0
      %1714 = vdwg.mxu0
      %s1715 = scalar_lea.vmem %s10, 8
      %v1716 = vld [vmem:[%s1715] sm:$0xf]
      %v1717 = vpack.c.bf16 %v1599, %v1598
      %v1718 = vpack.c.bf16 %v1600, %v1600
      %1721 = vrot.lane.b32.xlu0 %v1717, 120
      %v1722 = vpop.permute.xlu0 %1721
      %1723 = vrot.lane.b32.xlu0 %v1718, 120
      %v1724 = vpop.permute.xlu0 %1723
      %v1727 = vsel %vm1615, %v1716, 0
      %v1730 = vsel %vm721, %v1724, 0
      %1732 = vmatprep.subr.bf16.mxu0 0
      %1733 = vmatpush1.bf16.msra.mxu0 %v1722
      %1734 = vmatprep.subr.bf16.mxu0 0
      %1735 = vmatpush1.bf16.msra.mxu0 %v1730
      %1736 = vmatprep.subr.bf16.mxu0 0
      %1737 = vmatpush1.bf16.msra.mxu0 0
      %1738 = vmatprep.subr.bf16.mxu0 0
      %1739 = vmatpush1.bf16.msra.mxu0 0
      %1740 = vmatprep.subr.bf16.mxu0 0
      %1741 = vmatpush1.bf16.msra.mxu0 0
      %1742 = vmatprep.subr.bf16.mxu0 0
      %1743 = vmatpush1.bf16.msra.mxu0 0
      %1744 = vmatprep.subr.bf16.mxu0 0
      %1745 = vmatpush1.bf16.msra.mxu0 0
      %1746 = vmatprep.subr.bf16.mxu0 0
      %1747 = vmatpush1.bf16.msra.mxu0 0
      %1748 = vmatprep.subr.bf16.mxu0 0
      %1749 = vmatpush1.bf16.msra.mxu0 0
      %1750 = vmatprep.subr.bf16.mxu0 0
      %1751 = vmatpush1.bf16.msra.mxu0 0
      %1752 = vmatprep.subr.bf16.mxu0 0
      %1753 = vmatpush1.bf16.msra.mxu0 0
      %1754 = vmatprep.subr.bf16.mxu0 0
      %1755 = vmatpush1.bf16.msra.mxu0 0
      %1756 = vmatprep.subr.bf16.mxu0 0
      %1757 = vmatpush1.bf16.msra.mxu0 0
      %1758 = vmatprep.subr.bf16.mxu0 0
      %1759 = vmatpush1.bf16.msra.mxu0 0
      %1760 = vmatprep.subr.bf16.mxu0 0
      %1761 = vmatpush1.bf16.msra.mxu0 0
      %1762 = vmatprep.subr.bf16.mxu0 0
      %1763 = vmatpush1.bf16.msra.mxu0 0
      %1764 = vmatprep.mubr.bf16.mxu0 0
      %1765 = vmatmul.mubr.bf16.gmra.mrb[0].mxu0 %v1727
      %v1766 = vpop.f32.mrb[0].mxu0
      %v1767 = vadd.f32 0.0, %v1766
      %v1768 = vpop.f32.mrb[0].mxu0
      %v1769 = vpop.f32.mrb[0].mxu0
      %v1770 = vpop.f32.mrb[0].mxu0
      %1771 = vdwg.mxu0
      %v1772 = vadd.f32 %v1710, %v1767
      %v1773 = vsel %vm1472, %v1772, 0.0
      %1774 = vadd.xlane.f32.xlu0 %v1773
      %v1775 = vpop.xlane.xlu0 %1774
      %v1776 = vrot.slane %v1775, 4
      %v1777 = vadd.f32 %v1775, %v1776
      %v1778 = vrot.slane %v1777, 2
      %v1779 = vadd.f32 %v1777, %v1778
      %v1780 = vrot.slane %v1779, 1
      %v1781 = vadd.f32 %v1779, %v1780
      %s1782 = vtos %v1781
      %v1783 = vmul.f32 %v1772, %v1772
      %v1784 = vsel %vm1472, %v1783, 0.0
      %1785 = vadd.xlane.f32.xlu0 %v1784
      %v1786 = vpop.xlane.xlu0 %1785
      %v1787 = vrot.slane %v1786, 4
      %v1788 = vadd.f32 %v1786, %v1787
      %v1789 = vrot.slane %v1788, 2
      %v1790 = vadd.f32 %v1788, %v1789
      %v1791 = vrot.slane %v1790, 1
      %v1792 = vadd.f32 %v1790, %v1791
      %s1793 = vtos %v1792
      %v1794 = vrcp.pop 512.0
      %s1795 = vtos %v1794
      %s1796 = smul.f32 %s1782, %s1795
      %v1797 = vrcp.pop 512.0
      %s1798 = vtos %v1797
      %s1799 = smul.f32 %s1793, %s1798
      %s1800 = smul.f32 %s1796, %s1796
      %s1801 = ssub.f32 %s1799, %s1800
      %v1802 = vstv %s1796
      %v1803 = vsub.f32 %v1772, %v1802
      %s1804 = sadd.f32 %s1801, 1e-05
      %v1805 = vstv %s1804
      %v1806 = vrsqrt.pop %v1805
      %s1807 = vtos %v1806
      %v1808 = vstv %s1807
      %v1809 = vmul.f32 %v1803, %v1808
      %v1810 = vld [vmem:[%s11] sm:$0xff]
      %1812 = vset.pattern.permute.xlu0 0
      %1813 = vperm.xlu0 %1812, %v1810
      %v1814 = vpop.permute.xlu0 %1813
      %v1816 = vmul.f32 %v1809, %v1814
      %v1817 = vld [vmem:[%s12] sm:$0xff]
      %1819 = vset.pattern.permute.xlu0 0
      %1820 = vperm.xlu0 %1819, %v1817
      %v1821 = vpop.permute.xlu0 %1820
      %v1823 = vadd.f32 %v1816, %v1821
      %v1824 = vld [vmem:[%s505] sm:$0xff]
      %1826 = vset.pattern.permute.xlu0 0
      %1827 = vperm.xlu0 %1826, %v1824
      %v1828 = vpop.permute.xlu0 %1827
      %v1830 = vadd.f32 %v1823, %v1828
      %1831 = vst.msk [vmem:[%s509] sm:$0xff] %vm1472, %v1830
      %p1832 = scmp.lt.s32.totalorder %s26, 1
      %s1833 = scalar_select %p1832, %s26, 1
      %s1834 = smul.addr %s1833, 8
      %s1835 = scalar_lea.vmem %s15, %s1834
      // Predicated region
      $region81: #{down_forward.1} parent=79 // pred_check
        %p1836 = pneg %p369
      $region82: #{down_forward.1} parent=79 // pred_check_branch
        %1838 = sbr.rel (%p1836) target = $region84
      $region83: #{down_forward.1} parent=79 // pred_region
        _
      $region84: #{down_forward.1} parent=79 // pred_fallthru
        _
    $region80: #{down_forward.1} parent=5 // pred_fallthru
      _
    %p1839 = scmp.le.s32.totalorder 2, %s21
    // Predicated region
    $region85: #{down_forward.1} parent=5 // pred_check
      %p1840 = pneg %p1839
    $region86: #{down_forward.1} parent=5 // pred_check_branch
      %1842 = sbr.rel (%p1840) target = $region88
    $region87: #{down_forward.1} parent=5 // pred_region
      %s1843 = ssub.s32 %s21, 2
      // Predicated region
      $region89: #{down_forward.1} parent=87 // pred_check
        %p1844 = pneg %p375
      $region90: #{down_forward.1} parent=87 // pred_check_branch
        %1846 = sbr.rel (%p1844) target = $region92
      $region91: #{down_forward.1} parent=87 // pred_region
        %p1847 = scmp.lt.s32.totalorder %s27, 1
        %s1848 = scalar_select %p1847, %s27, 1
        %s1849 = smul.addr %s1848, 8
        %s1850 = scalar_lea.vmem %s15, %s1849
      $region92: #{down_forward.1} parent=87 // pred_fallthru
        _
    $region88: #{down_forward.1} parent=5 // pred_fallthru
      _
  $region6: #{down_forward.1} parent=0 // loop_footer
    %s25 = sadd.s32 1, %s21
  $region7: #{down_forward.1} parent=0 // loop_footer_branch
    %20 = sbr.rel target = $region3
  $region8: #{down_forward.1} parent=0 // loop_exit
    _

</llo_original>
